<compile_context>
chip_gen: v6e
topology: v6e:2x2x1
jax: 0.10.0
libtpu: 0.0.40
codegen_flags: <defaults>
</compile_context>

<pallas_src>
import functools

import jax
import jax.numpy as jnp
from jax.experimental import pallas as pl
from jax.experimental.pallas import tpu as pltpu


_MXU_DTYPE = jnp.bfloat16   # MXU feed dtype (accumulation is always f32)
_Y_DTYPE = jnp.bfloat16     # dtype of the conv intermediate written to HBM


# ----------------------------------------------------------------------------
# Kernel 1: per-tap accumulated matmul conv + fused per-channel BN stat partials.
#   x_ref   : (NB, C_in_p, FL)       flattened, spatially padded images (bf16)
#   w_ref   : (KH*KW, C_out, C_in_p) per-tap weight slices (bf16)
#   y_ref   : (NB, C_out, LW)        conv output on the padded-width grid (bf16)
#   sum_ref : (1, C_out, 1)          per-step per-channel sum over valid lanes (f32)
#   sq_ref  : (1, C_out, 1)          per-step per-channel sum of squares (f32)
# ----------------------------------------------------------------------------
def _conv_stats_kernel(x_ref, w_ref, y_ref, sum_ref, sq_ref, *,
                       kh, kw, wp, ow, lw, nb):
    c_out = w_ref.shape[1]

    # Valid-lane mask: lane t maps to (row = t // Wp, col = t % Wp); only
    # col < OW are real output pixels (the rest are window wrap-around values
    # that get sliced away in the wrapper).  Hoisted out of the batch loop.
    col = jax.lax.broadcasted_iota(jnp.int32, (1, lw), 1)
    valid = ((col % wp) < ow).astype(jnp.float32)            # (1, LW)

    tot_sum = jnp.zeros((c_out, 1), jnp.float32)
    tot_sq = jnp.zeros((c_out, 1), jnp.float32)

    for b in range(nb):                                      # static unroll
        acc = None
        for ki in range(kh):
            for kj in range(kw):
                d = ki * wp + kj                             # static lane shift
                x_slice = x_ref[b, :, d:d + lw]              # (C_in_p, LW) bf16
                w_tap = w_ref[ki * kw + kj]                  # (C_out, C_in_p) bf16
                part = jnp.dot(w_tap, x_slice,
                               preferred_element_type=jnp.float32)
                # TODO(synk): on v7x the 9 tap matmuls could accumulate in the
                # MRB instead of f32 VPU adds; not expressible from Pallas yet.
                acc = part if acc is None else acc + part    # (C_out, LW) f32

        y_ref[b] = acc.astype(y_ref.dtype)                   # dense LW-lane store

        masked = acc * valid                                 # zero invalid lanes
        tot_sum = tot_sum + jnp.sum(masked, axis=1, keepdims=True)
        tot_sq = tot_sq + jnp.sum(masked * acc, axis=1, keepdims=True)

    sum_ref[0] = tot_sum
    sq_ref[0] = tot_sq


# ----------------------------------------------------------------------------
# Kernel 2: apply BatchNorm affine (precomputed scale/shift) + ReLU.
#   y_ref     : (NB2, C_out, LW) bf16
#   scale_ref : (C_out, 1) f32
#   shift_ref : (C_out, 1) f32
#   o_ref     : (NB2, C_out, LW) f32
# ----------------------------------------------------------------------------
def _bn_relu_kernel(y_ref, scale_ref, shift_ref, o_ref):
    y = y_ref[...].astype(jnp.float32)
    o_ref[...] = jnp.maximum(y * scale_ref[...] + shift_ref[...], 0.0)


# ----------------------------------------------------------------------------
# Wrapper: layout plumbing + the two pallas_calls.
# ----------------------------------------------------------------------------
def conv_block_forward(x, weight, bias, gamma, beta, *, stride, pad, eps=1e-5):
    """x: (N, C_in, H, W), weight: (C_out, C_in, KH, KW). Returns NCHW f32."""
    del bias  # train-mode BatchNorm mean subtraction cancels the conv bias exactly
    if stride != 1:
        # TODO(synk): stride > 1 needs a strided variant of the lane-shift trick.
        raise NotImplementedError("only stride=1 is implemented")

    n, c_in, h, w = x.shape
    c_out, _, kh, kw = weight.shape
    hp, wp = h + 2 * pad, w + 2 * pad
    oh, ow = hp - kh + 1, wp - kw + 1
    lw = oh * wp                      # conv output length on the padded-width grid
    fl = hp * wp + (kw - 1)           # flat input length (+ tail so every tap's
                                      # length-LW slice stays in bounds)
    c_in_p = -(-c_in // 8) * 8        # sublane-align the contraction dim

    # Batch tile: NB images per grid step (whole batch at small N).
    nb = max(1, min(n, 16))
    n_pad = -(-n // nb) * nb          # zero images contribute 0 to both BN sums

    # Flatten each padded image per channel; keep NCHW ordering (no HBM
    # transpose), bf16 for half the DMA bytes.
    xp = jnp.pad(x, ((0, n_pad - n), (0, c_in_p - c_in), (pad, pad), (pad, pad)))
    x_flat = jnp.pad(xp.reshape(n_pad, c_in_p, hp * wp),
                     ((0, 0), (0, 0), (0, fl - hp * wp))).astype(_MXU_DTYPE)

    # Weight as per-tap (C_out, C_in_p) slices: w_taps[ki*kw+kj] = W[:, :, ki, kj].
    w_taps = jnp.transpose(weight, (2, 3, 0, 1)).reshape(kh * kw, c_out, c_in)
    w_taps = jnp.pad(w_taps, ((0, 0), (0, 0), (0, c_in_p - c_in))).astype(_MXU_DTYPE)

    n_tiles = n_pad // nb
    cparams = pltpu.CompilerParams(dimension_semantics=("parallel",),
                                   vmem_limit_bytes=32 * 1024 * 1024)

    kernel1 = functools.partial(_conv_stats_kernel,
                                kh=kh, kw=kw, wp=wp, ow=ow, lw=lw, nb=nb)

    y, s1, s2 = pl.pallas_call(
        kernel1,
        out_shape=(
            jax.ShapeDtypeStruct((n_pad, c_out, lw), _Y_DTYPE),   # conv out (bf16)
            jax.ShapeDtypeStruct((n_tiles, c_out, 1), jnp.float32),  # per-step sum
            jax.ShapeDtypeStruct((n_tiles, c_out, 1), jnp.float32),  # per-step sumsq
        ),
        grid=(n_tiles,),
        in_specs=[
            pl.BlockSpec((nb, c_in_p, fl), lambda i: (i, 0, 0)),
            pl.BlockSpec((kh * kw, c_out, c_in_p), lambda i: (0, 0, 0)),
        ],
        out_specs=(
            pl.BlockSpec((nb, c_out, lw), lambda i: (i, 0, 0)),
            pl.BlockSpec((1, c_out, 1), lambda i: (i, 0, 0)),
            pl.BlockSpec((1, c_out, 1), lambda i: (i, 0, 0)),
        ),
        compiler_params=cparams,
    )(x_flat, w_taps)

    # Tiny per-channel reduction -> BN scale/shift (true batch count, f32 math).
    count = float(n * oh * ow)
    ch_sum = jnp.sum(s1[:, :, 0], axis=0)
    ch_sq = jnp.sum(s2[:, :, 0], axis=0)
    mean = ch_sum / count
    var = jnp.maximum(ch_sq / count - mean * mean, 0.0)  # biased var, clamp >= 0
    scale = gamma.astype(jnp.float32) * jax.lax.rsqrt(var + eps)
    shift = beta.astype(jnp.float32) - mean * scale

    out_full = pl.pallas_call(
        _bn_relu_kernel,
        out_shape=jax.ShapeDtypeStruct((n_pad, c_out, lw), jnp.float32),
        grid=(n_tiles,),
        in_specs=[
            pl.BlockSpec((nb, c_out, lw), lambda i: (i, 0, 0)),
            pl.BlockSpec((c_out, 1), lambda i: (0, 0)),
            pl.BlockSpec((c_out, 1), lambda i: (0, 0)),
        ],
        out_specs=pl.BlockSpec((nb, c_out, lw), lambda i: (i, 0, 0)),
        compiler_params=cparams,
    )(y, scale.reshape(c_out, 1), shift.reshape(c_out, 1))

    # Padded-width grid -> NCHW: one cheap XLA slice on the small final tensor;
    # all in-kernel stores stayed lane-dense (LW = OH*Wp lanes).
    out = out_full.reshape(n_pad, c_out, oh, wp)[:n, :, :, :ow]
    return out


# ----------------------------------------------------------------------------
# Pure-JAX reference for verification (PyTorch train-mode semantics).
# ----------------------------------------------------------------------------
def conv_block_ref(x, weight, bias, gamma, beta, *, stride, pad, eps=1e-5):
    y = jax.lax.conv_general_dilated(
        x.astype(jnp.float32), weight.astype(jnp.float32),
        window_strides=(stride, stride),
        padding=((pad, pad), (pad, pad)),
        dimension_numbers=("NCHW", "OIHW", "NCHW"),
    ) + bias.reshape(1, -1, 1, 1)
    mean = jnp.mean(y, axis=(0, 2, 3), keepdims=True)
    var = jnp.mean((y - mean) ** 2, axis=(0, 2, 3), keepdims=True)
    y = (y - mean) * jax.lax.rsqrt(var + eps)
    y = y * gamma.reshape(1, -1, 1, 1) + beta.reshape(1, -1, 1, 1)
    return jnp.maximum(y, 0.0)


if __name__ == "__main__":
    # ConvBlock(in_ch=4, out_ch=8, kernel=3, stride=1, pad=1) on x: (2, 4, 16, 16)
    in_ch, out_ch, ksize, stride, pad = 4, 8, 3, 1, 1
    N, H, W = 2, 16, 16

    key = jax.random.PRNGKey(0)
    kx, kwt, kb = jax.random.split(key, 3)
    x = jax.random.normal(kx, (N, in_ch, H, W), dtype=jnp.float32)
    weight = jax.random.normal(kwt, (out_ch, in_ch, ksize, ksize), dtype=jnp.float32) * 0.1
    bias = jax.random.normal(kb, (out_ch,), dtype=jnp.float32) * 0.1
    gamma = jnp.ones((out_ch,), dtype=jnp.float32)   # BatchNorm2d default affine init
    beta = jnp.zeros((out_ch,), dtype=jnp.float32)

    fwd = jax.jit(functools.partial(conv_block_forward, stride=stride, pad=pad))
    out = jax.block_until_ready(fwd(x, weight, bias, gamma, beta))

    ref = conv_block_ref(x, weight, bias, gamma, beta, stride=stride, pad=pad)
    assert out.shape == (N, out_ch, H, W), out.shape
    # bf16 MXU inputs / bf16 intermediate (f32 accumulation & BN math) -> loose tol.
    max_err = float(jnp.max(jnp.abs(out - ref)))
    assert jnp.allclose(out, ref, atol=5e-2, rtol=5e-2), max_err

    print("KERNEL_OK")
</pallas_src>

<mosaic_0001>
module attributes {stable_mosaic.version = 11 : i64} {
  func.func @_conv_stats_kernel(%arg0: i32, %arg1: memref<2x8x326xbf16, #tpu.memory_space<vmem>>, %arg2: memref<9x8x8xbf16, #tpu.memory_space<vmem>>, %arg3: memref<2x8x288xbf16, #tpu.memory_space<vmem>>, %arg4: memref<1x8x1xf32, #tpu.memory_space<vmem>>, %arg5: memref<1x8x1xf32, #tpu.memory_space<vmem>>) attributes {dimension_semantics = [#tpu.dimension_semantics<parallel>], iteration_bounds = array<i64: 1>, scalar_prefetch = 0 : i64, scratch_operands = 0 : i64, tpu.core_type = #tpu.core_type<tc>, window_params = [{transform_indices = @transform_0, window_bounds = array<i64: 2, 8, 326>}, {pipeline_mode = #tpu.pipeline_mode<synchronous>, transform_indices = @transform_1, window_bounds = array<i64: 9, 8, 8>}, {transform_indices = @transform_2, window_bounds = array<i64: 2, 8, 288>}, {transform_indices = @transform_3, window_bounds = array<i64: 1, 8, 1>}, {transform_indices = @transform_4, window_bounds = array<i64: 1, 8, 1>}]} {
    %0 = tpu.iota {dimensions = array<i32: 1>} : vector<1x288xi32>
    %c18_i32 = arith.constant 18 : i32
    %c0_i32 = arith.constant 0 : i32
    %1 = arith.cmpi eq, %c18_i32, %c0_i32 : i32
    %c1_i32 = arith.constant 1 : i32
    %2 = arith.select %1, %c1_i32, %c18_i32 : i32
    %3 = vector.broadcast %2 : i32 to vector<1x288xi32>
    %4 = arith.remsi %0, %3 : vector<1x288xi32>
    %c0_i32_0 = arith.constant 0 : i32
    %5 = vector.broadcast %c0_i32_0 : i32 to vector<1x288xi32>
    %6 = arith.cmpi ne, %4, %5 : vector<1x288xi32>
    %c0_i32_1 = arith.constant 0 : i32
    %7 = vector.broadcast %c0_i32_1 : i32 to vector<1x288xi32>
    %8 = arith.cmpi slt, %4, %7 : vector<1x288xi32>
    %c0_i32_2 = arith.constant 0 : i32
    %9 = arith.cmpi slt, %2, %c0_i32_2 : i32
    %10 = vector.broadcast %9 : i1 to vector<1x288xi1>
    %11 = vector.broadcast %10 : vector<1x288xi1> to vector<1x288xi1>
    %12 = arith.xori %8, %11 : vector<1x288xi1>
    %13 = arith.andi %12, %6 : vector<1x288xi1>
    %14 = vector.broadcast %2 : i32 to vector<1x288xi32>
    %15 = arith.addi %4, %14 : vector<1x288xi32>
    %16 = arith.select %13, %15, %4 : vector<1x288xi1>, vector<1x288xi32>
    %c16_i32 = arith.constant 16 : i32
    %17 = vector.broadcast %c16_i32 : i32 to vector<1x288xi32>
    %18 = arith.cmpi slt, %16, %17 : vector<1x288xi32>
    %19 = arith.extui %18 : vector<1x288xi1> to vector<1x288xi32>
    %20 = arith.sitofp %19 : vector<1x288xi32> to vector<1x288xf32>
    %cst = arith.constant 0.000000e+00 : f32
    %21 = vector.broadcast %cst : f32 to vector<8x1xf32>
    %cst_3 = arith.constant 0.000000e+00 : f32
    %22 = vector.broadcast %cst_3 : f32 to vector<8x1xf32>
    %c0 = arith.constant 0 : index
    %c0_4 = arith.constant 0 : index
    %c0_5 = arith.constant 0 : index
    %23 = vector.load %arg1[%c0, %c0_4, %c0_5] : memref<2x8x326xbf16, #tpu.memory_space<vmem>>, vector<1x8x288xbf16>
    %24 = vector.shape_cast %23 : vector<1x8x288xbf16> to vector<8x288xbf16>
    %c0_6 = arith.constant 0 : index
    %c0_7 = arith.constant 0 : index
    %c0_8 = arith.constant 0 : index
    %25 = vector.load %arg2[%c0_6, %c0_7, %c0_8] : memref<9x8x8xbf16, #tpu.memory_space<vmem>>, vector<1x8x8xbf16>
    %26 = vector.shape_cast %25 : vector<1x8x8xbf16> to vector<8x8xbf16>
    %cst_9 = arith.constant dense<0.000000e+00> : vector<8x288xf32>
    %27 = tpu.matmul %26, %24, %cst_9 {dimension_numbers = #tpu.dot_dimension_numbers<[1], [0], [0], [1], [0, 0, 1, 1], [], []>} : vector<8x8xbf16>, vector<8x288xbf16>, vector<8x288xf32> -> vector<8x288xf32>
    %c0_10 = arith.constant 0 : index
    %c0_11 = arith.constant 0 : index
    %c1 = arith.constant 1 : index
    %28 = vector.load %arg1[%c0_10, %c0_11, %c1] : memref<2x8x326xbf16, #tpu.memory_space<vmem>>, vector<1x8x288xbf16>
    %29 = vector.shape_cast %28 : vector<1x8x288xbf16> to vector<8x288xbf16>
    %c1_12 = arith.constant 1 : index
    %c0_13 = arith.constant 0 : index
    %c0_14 = arith.constant 0 : index
    %30 = vector.load %arg2[%c1_12, %c0_13, %c0_14] : memref<9x8x8xbf16, #tpu.memory_space<vmem>>, vector<1x8x8xbf16>
    %31 = vector.shape_cast %30 : vector<1x8x8xbf16> to vector<8x8xbf16>
    %cst_15 = arith.constant dense<0.000000e+00> : vector<8x288xf32>
    %32 = tpu.matmul %31, %29, %cst_15 {dimension_numbers = #tpu.dot_dimension_numbers<[1], [0], [0], [1], [0, 0, 1, 1], [], []>} : vector<8x8xbf16>, vector<8x288xbf16>, vector<8x288xf32> -> vector<8x288xf32>
    %33 = arith.addf %27, %32 : vector<8x288xf32>
    %c0_16 = arith.constant 0 : index
    %c0_17 = arith.constant 0 : index
    %c2 = arith.constant 2 : index
    %34 = vector.load %arg1[%c0_16, %c0_17, %c2] : memref<2x8x326xbf16, #tpu.memory_space<vmem>>, vector<1x8x288xbf16>
    %35 = vector.shape_cast %34 : vector<1x8x288xbf16> to vector<8x288xbf16>
    %c2_18 = arith.constant 2 : index
    %c0_19 = arith.constant 0 : index
    %c0_20 = arith.constant 0 : index
    %36 = vector.load %arg2[%c2_18, %c0_19, %c0_20] : memref<9x8x8xbf16, #tpu.memory_space<vmem>>, vector<1x8x8xbf16>
    %37 = vector.shape_cast %36 : vector<1x8x8xbf16> to vector<8x8xbf16>
    %cst_21 = arith.constant dense<0.000000e+00> : vector<8x288xf32>
    %38 = tpu.matmul %37, %35, %cst_21 {dimension_numbers = #tpu.dot_dimension_numbers<[1], [0], [0], [1], [0, 0, 1, 1], [], []>} : vector<8x8xbf16>, vector<8x288xbf16>, vector<8x288xf32> -> vector<8x288xf32>
    %39 = arith.addf %33, %38 : vector<8x288xf32>
    %c0_22 = arith.constant 0 : index
    %c0_23 = arith.constant 0 : index
    %c18 = arith.constant 18 : index
    %40 = vector.load %arg1[%c0_22, %c0_23, %c18] : memref<2x8x326xbf16, #tpu.memory_space<vmem>>, vector<1x8x288xbf16>
    %41 = vector.shape_cast %40 : vector<1x8x288xbf16> to vector<8x288xbf16>
    %c3 = arith.constant 3 : index
    %c0_24 = arith.constant 0 : index
    %c0_25 = arith.constant 0 : index
    %42 = vector.load %arg2[%c3, %c0_24, %c0_25] : memref<9x8x8xbf16, #tpu.memory_space<vmem>>, vector<1x8x8xbf16>
    %43 = vector.shape_cast %42 : vector<1x8x8xbf16> to vector<8x8xbf16>
    %cst_26 = arith.constant dense<0.000000e+00> : vector<8x288xf32>
    %44 = tpu.matmul %43, %41, %cst_26 {dimension_numbers = #tpu.dot_dimension_numbers<[1], [0], [0], [1], [0, 0, 1, 1], [], []>} : vector<8x8xbf16>, vector<8x288xbf16>, vector<8x288xf32> -> vector<8x288xf32>
    %45 = arith.addf %39, %44 : vector<8x288xf32>
    %c0_27 = arith.constant 0 : index
    %c0_28 = arith.constant 0 : index
    %c19 = arith.constant 19 : index
    %46 = vector.load %arg1[%c0_27, %c0_28, %c19] : memref<2x8x326xbf16, #tpu.memory_space<vmem>>, vector<1x8x288xbf16>
    %47 = vector.shape_cast %46 : vector<1x8x288xbf16> to vector<8x288xbf16>
    %c4 = arith.constant 4 : index
    %c0_29 = arith.constant 0 : index
    %c0_30 = arith.constant 0 : index
    %48 = vector.load %arg2[%c4, %c0_29, %c0_30] : memref<9x8x8xbf16, #tpu.memory_space<vmem>>, vector<1x8x8xbf16>
    %49 = vector.shape_cast %48 : vector<1x8x8xbf16> to vector<8x8xbf16>
    %cst_31 = arith.constant dense<0.000000e+00> : vector<8x288xf32>
    %50 = tpu.matmul %49, %47, %cst_31 {dimension_numbers = #tpu.dot_dimension_numbers<[1], [0], [0], [1], [0, 0, 1, 1], [], []>} : vector<8x8xbf16>, vector<8x288xbf16>, vector<8x288xf32> -> vector<8x288xf32>
    %51 = arith.addf %45, %50 : vector<8x288xf32>
    %c0_32 = arith.constant 0 : index
    %c0_33 = arith.constant 0 : index
    %c20 = arith.constant 20 : index
    %52 = vector.load %arg1[%c0_32, %c0_33, %c20] : memref<2x8x326xbf16, #tpu.memory_space<vmem>>, vector<1x8x288xbf16>
    %53 = vector.shape_cast %52 : vector<1x8x288xbf16> to vector<8x288xbf16>
    %c5 = arith.constant 5 : index
    %c0_34 = arith.constant 0 : index
    %c0_35 = arith.constant 0 : index
    %54 = vector.load %arg2[%c5, %c0_34, %c0_35] : memref<9x8x8xbf16, #tpu.memory_space<vmem>>, vector<1x8x8xbf16>
    %55 = vector.shape_cast %54 : vector<1x8x8xbf16> to vector<8x8xbf16>
    %cst_36 = arith.constant dense<0.000000e+00> : vector<8x288xf32>
    %56 = tpu.matmul %55, %53, %cst_36 {dimension_numbers = #tpu.dot_dimension_numbers<[1], [0], [0], [1], [0, 0, 1, 1], [], []>} : vector<8x8xbf16>, vector<8x288xbf16>, vector<8x288xf32> -> vector<8x288xf32>
    %57 = arith.addf %51, %56 : vector<8x288xf32>
    %c0_37 = arith.constant 0 : index
    %c0_38 = arith.constant 0 : index
    %c36 = arith.constant 36 : index
    %58 = vector.load %arg1[%c0_37, %c0_38, %c36] : memref<2x8x326xbf16, #tpu.memory_space<vmem>>, vector<1x8x288xbf16>
    %59 = vector.shape_cast %58 : vector<1x8x288xbf16> to vector<8x288xbf16>
    %c6 = arith.constant 6 : index
    %c0_39 = arith.constant 0 : index
    %c0_40 = arith.constant 0 : index
    %60 = vector.load %arg2[%c6, %c0_39, %c0_40] : memref<9x8x8xbf16, #tpu.memory_space<vmem>>, vector<1x8x8xbf16>
    %61 = vector.shape_cast %60 : vector<1x8x8xbf16> to vector<8x8xbf16>
    %cst_41 = arith.constant dense<0.000000e+00> : vector<8x288xf32>
    %62 = tpu.matmul %61, %59, %cst_41 {dimension_numbers = #tpu.dot_dimension_numbers<[1], [0], [0], [1], [0, 0, 1, 1], [], []>} : vector<8x8xbf16>, vector<8x288xbf16>, vector<8x288xf32> -> vector<8x288xf32>
    %63 = arith.addf %57, %62 : vector<8x288xf32>
    %c0_42 = arith.constant 0 : index
    %c0_43 = arith.constant 0 : index
    %c37 = arith.constant 37 : index
    %64 = vector.load %arg1[%c0_42, %c0_43, %c37] : memref<2x8x326xbf16, #tpu.memory_space<vmem>>, vector<1x8x288xbf16>
    %65 = vector.shape_cast %64 : vector<1x8x288xbf16> to vector<8x288xbf16>
    %c7 = arith.constant 7 : index
    %c0_44 = arith.constant 0 : index
    %c0_45 = arith.constant 0 : index
    %66 = vector.load %arg2[%c7, %c0_44, %c0_45] : memref<9x8x8xbf16, #tpu.memory_space<vmem>>, vector<1x8x8xbf16>
    %67 = vector.shape_cast %66 : vector<1x8x8xbf16> to vector<8x8xbf16>
    %cst_46 = arith.constant dense<0.000000e+00> : vector<8x288xf32>
    %68 = tpu.matmul %67, %65, %cst_46 {dimension_numbers = #tpu.dot_dimension_numbers<[1], [0], [0], [1], [0, 0, 1, 1], [], []>} : vector<8x8xbf16>, vector<8x288xbf16>, vector<8x288xf32> -> vector<8x288xf32>
    %69 = arith.addf %63, %68 : vector<8x288xf32>
    %c0_47 = arith.constant 0 : index
    %c0_48 = arith.constant 0 : index
    %c38 = arith.constant 38 : index
    %70 = vector.load %arg1[%c0_47, %c0_48, %c38] : memref<2x8x326xbf16, #tpu.memory_space<vmem>>, vector<1x8x288xbf16>
    %71 = vector.shape_cast %70 : vector<1x8x288xbf16> to vector<8x288xbf16>
    %c8 = arith.constant 8 : index
    %c0_49 = arith.constant 0 : index
    %c0_50 = arith.constant 0 : index
    %72 = vector.load %arg2[%c8, %c0_49, %c0_50] : memref<9x8x8xbf16, #tpu.memory_space<vmem>>, vector<1x8x8xbf16>
    %73 = vector.shape_cast %72 : vector<1x8x8xbf16> to vector<8x8xbf16>
    %cst_51 = arith.constant dense<0.000000e+00> : vector<8x288xf32>
    %74 = tpu.matmul %73, %71, %cst_51 {dimension_numbers = #tpu.dot_dimension_numbers<[1], [0], [0], [1], [0, 0, 1, 1], [], []>} : vector<8x8xbf16>, vector<8x288xbf16>, vector<8x288xf32> -> vector<8x288xf32>
    %75 = arith.addf %69, %74 : vector<8x288xf32>
    %76 = arith.truncf %75 : vector<8x288xf32> to vector<8x288xbf16>
    %c0_52 = arith.constant 0 : index
    %c0_53 = arith.constant 0 : index
    %c0_54 = arith.constant 0 : index
    %77 = vector.load %arg3[%c0_52, %c0_53, %c0_54] : memref<2x8x288xbf16, #tpu.memory_space<vmem>>, vector<1x8x288xbf16>
    %78 = vector.shape_cast %77 : vector<1x8x288xbf16> to vector<8x288xbf16>
    %79 = vector.shape_cast %76 : vector<8x288xbf16> to vector<1x8x288xbf16>
    tpu.vector_store %arg3[%c0_52, %c0_53, %c0_54], %79 {strides = array<i32>} : memref<2x8x288xbf16, #tpu.memory_space<vmem>>, vector<1x8x288xbf16>,
    %80 = vector.broadcast %20 : vector<1x288xf32> to vector<8x288xf32>
    %81 = arith.mulf %75, %80 : vector<8x288xf32>
    %cst_55 = arith.constant dense<0.000000e+00> : vector<8xf32>
    %82 = vector.multi_reduction <add>, %81, %cst_55 [1] : vector<8x288xf32> to vector<8xf32>
    %83 = vector.shape_cast %82 : vector<8xf32> to vector<8x1xf32>
    %84 = arith.addf %21, %83 : vector<8x1xf32>
    %85 = arith.mulf %81, %75 : vector<8x288xf32>
    %cst_56 = arith.constant dense<0.000000e+00> : vector<8xf32>
    %86 = vector.multi_reduction <add>, %85, %cst_56 [1] : vector<8x288xf32> to vector<8xf32>
    %87 = vector.shape_cast %86 : vector<8xf32> to vector<8x1xf32>
    %88 = arith.addf %22, %87 : vector<8x1xf32>
    %c1_57 = arith.constant 1 : index
    %c0_58 = arith.constant 0 : index
    %c0_59 = arith.constant 0 : index
    %89 = vector.load %arg1[%c1_57, %c0_58, %c0_59] : memref<2x8x326xbf16, #tpu.memory_space<vmem>>, vector<1x8x288xbf16>
    %90 = vector.shape_cast %89 : vector<1x8x288xbf16> to vector<8x288xbf16>
    %c0_60 = arith.constant 0 : index
    %c0_61 = arith.constant 0 : index
    %c0_62 = arith.constant 0 : index
    %91 = vector.load %arg2[%c0_60, %c0_61, %c0_62] : memref<9x8x8xbf16, #tpu.memory_space<vmem>>, vector<1x8x8xbf16>
    %92 = vector.shape_cast %91 : vector<1x8x8xbf16> to vector<8x8xbf16>
    %cst_63 = arith.constant dense<0.000000e+00> : vector<8x288xf32>
    %93 = tpu.matmul %92, %90, %cst_63 {dimension_numbers = #tpu.dot_dimension_numbers<[1], [0], [0], [1], [0, 0, 1, 1], [], []>} : vector<8x8xbf16>, vector<8x288xbf16>, vector<8x288xf32> -> vector<8x288xf32>
    %c1_64 = arith.constant 1 : index
    %c0_65 = arith.constant 0 : index
    %c1_66 = arith.constant 1 : index
    %94 = vector.load %arg1[%c1_64, %c0_65, %c1_66] : memref<2x8x326xbf16, #tpu.memory_space<vmem>>, vector<1x8x288xbf16>
    %95 = vector.shape_cast %94 : vector<1x8x288xbf16> to vector<8x288xbf16>
    %c1_67 = arith.constant 1 : index
    %c0_68 = arith.constant 0 : index
    %c0_69 = arith.constant 0 : index
    %96 = vector.load %arg2[%c1_67, %c0_68, %c0_69] : memref<9x8x8xbf16, #tpu.memory_space<vmem>>, vector<1x8x8xbf16>
    %97 = vector.shape_cast %96 : vector<1x8x8xbf16> to vector<8x8xbf16>
    %cst_70 = arith.constant dense<0.000000e+00> : vector<8x288xf32>
    %98 = tpu.matmul %97, %95, %cst_70 {dimension_numbers = #tpu.dot_dimension_numbers<[1], [0], [0], [1], [0, 0, 1, 1], [], []>} : vector<8x8xbf16>, vector<8x288xbf16>, vector<8x288xf32> -> vector<8x288xf32>
    %99 = arith.addf %93, %98 : vector<8x288xf32>
    %c1_71 = arith.constant 1 : index
    %c0_72 = arith.constant 0 : index
    %c2_73 = arith.constant 2 : index
    %100 = vector.load %arg1[%c1_71, %c0_72, %c2_73] : memref<2x8x326xbf16, #tpu.memory_space<vmem>>, vector<1x8x288xbf16>
    %101 = vector.shape_cast %100 : vector<1x8x288xbf16> to vector<8x288xbf16>
    %c2_74 = arith.constant 2 : index
    %c0_75 = arith.constant 0 : index
    %c0_76 = arith.constant 0 : index
    %102 = vector.load %arg2[%c2_74, %c0_75, %c0_76] : memref<9x8x8xbf16, #tpu.memory_space<vmem>>, vector<1x8x8xbf16>
    %103 = vector.shape_cast %102 : vector<1x8x8xbf16> to vector<8x8xbf16>
    %cst_77 = arith.constant dense<0.000000e+00> : vector<8x288xf32>
    %104 = tpu.matmul %103, %101, %cst_77 {dimension_numbers = #tpu.dot_dimension_numbers<[1], [0], [0], [1], [0, 0, 1, 1], [], []>} : vector<8x8xbf16>, vector<8x288xbf16>, vector<8x288xf32> -> vector<8x288xf32>
    %105 = arith.addf %99, %104 : vector<8x288xf32>
    %c1_78 = arith.constant 1 : index
    %c0_79 = arith.constant 0 : index
    %c18_80 = arith.constant 18 : index
    %106 = vector.load %arg1[%c1_78, %c0_79, %c18_80] : memref<2x8x326xbf16, #tpu.memory_space<vmem>>, vector<1x8x288xbf16>
    %107 = vector.shape_cast %106 : vector<1x8x288xbf16> to vector<8x288xbf16>
    %c3_81 = arith.constant 3 : index
    %c0_82 = arith.constant 0 : index
    %c0_83 = arith.constant 0 : index
    %108 = vector.load %arg2[%c3_81, %c0_82, %c0_83] : memref<9x8x8xbf16, #tpu.memory_space<vmem>>, vector<1x8x8xbf16>
    %109 = vector.shape_cast %108 : vector<1x8x8xbf16> to vector<8x8xbf16>
    %cst_84 = arith.constant dense<0.000000e+00> : vector<8x288xf32>
    %110 = tpu.matmul %109, %107, %cst_84 {dimension_numbers = #tpu.dot_dimension_numbers<[1], [0], [0], [1], [0, 0, 1, 1], [], []>} : vector<8x8xbf16>, vector<8x288xbf16>, vector<8x288xf32> -> vector<8x288xf32>
    %111 = arith.addf %105, %110 : vector<8x288xf32>
    %c1_85 = arith.constant 1 : index
    %c0_86 = arith.constant 0 : index
    %c19_87 = arith.constant 19 : index
    %112 = vector.load %arg1[%c1_85, %c0_86, %c19_87] : memref<2x8x326xbf16, #tpu.memory_space<vmem>>, vector<1x8x288xbf16>
    %113 = vector.shape_cast %112 : vector<1x8x288xbf16> to vector<8x288xbf16>
    %c4_88 = arith.constant 4 : index
    %c0_89 = arith.constant 0 : index
    %c0_90 = arith.constant 0 : index
    %114 = vector.load %arg2[%c4_88, %c0_89, %c0_90] : memref<9x8x8xbf16, #tpu.memory_space<vmem>>, vector<1x8x8xbf16>
    %115 = vector.shape_cast %114 : vector<1x8x8xbf16> to vector<8x8xbf16>
    %cst_91 = arith.constant dense<0.000000e+00> : vector<8x288xf32>
    %116 = tpu.matmul %115, %113, %cst_91 {dimension_numbers = #tpu.dot_dimension_numbers<[1], [0], [0], [1], [0, 0, 1, 1], [], []>} : vector<8x8xbf16>, vector<8x288xbf16>, vector<8x288xf32> -> vector<8x288xf32>
    %117 = arith.addf %111, %116 : vector<8x288xf32>
    %c1_92 = arith.constant 1 : index
    %c0_93 = arith.constant 0 : index
    %c20_94 = arith.constant 20 : index
    %118 = vector.load %arg1[%c1_92, %c0_93, %c20_94] : memref<2x8x326xbf16, #tpu.memory_space<vmem>>, vector<1x8x288xbf16>
    %119 = vector.shape_cast %118 : vector<1x8x288xbf16> to vector<8x288xbf16>
    %c5_95 = arith.constant 5 : index
    %c0_96 = arith.constant 0 : index
    %c0_97 = arith.constant 0 : index
    %120 = vector.load %arg2[%c5_95, %c0_96, %c0_97] : memref<9x8x8xbf16, #tpu.memory_space<vmem>>, vector<1x8x8xbf16>
    %121 = vector.shape_cast %120 : vector<1x8x8xbf16> to vector<8x8xbf16>
    %cst_98 = arith.constant dense<0.000000e+00> : vector<8x288xf32>
    %122 = tpu.matmul %121, %119, %cst_98 {dimension_numbers = #tpu.dot_dimension_numbers<[1], [0], [0], [1], [0, 0, 1, 1], [], []>} : vector<8x8xbf16>, vector<8x288xbf16>, vector<8x288xf32> -> vector<8x288xf32>
    %123 = arith.addf %117, %122 : vector<8x288xf32>
    %c1_99 = arith.constant 1 : index
    %c0_100 = arith.constant 0 : index
    %c36_101 = arith.constant 36 : index
    %124 = vector.load %arg1[%c1_99, %c0_100, %c36_101] : memref<2x8x326xbf16, #tpu.memory_space<vmem>>, vector<1x8x288xbf16>
    %125 = vector.shape_cast %124 : vector<1x8x288xbf16> to vector<8x288xbf16>
    %c6_102 = arith.constant 6 : index
    %c0_103 = arith.constant 0 : index
    %c0_104 = arith.constant 0 : index
    %126 = vector.load %arg2[%c6_102, %c0_103, %c0_104] : memref<9x8x8xbf16, #tpu.memory_space<vmem>>, vector<1x8x8xbf16>
    %127 = vector.shape_cast %126 : vector<1x8x8xbf16> to vector<8x8xbf16>
    %cst_105 = arith.constant dense<0.000000e+00> : vector<8x288xf32>
    %128 = tpu.matmul %127, %125, %cst_105 {dimension_numbers = #tpu.dot_dimension_numbers<[1], [0], [0], [1], [0, 0, 1, 1], [], []>} : vector<8x8xbf16>, vector<8x288xbf16>, vector<8x288xf32> -> vector<8x288xf32>
    %129 = arith.addf %123, %128 : vector<8x288xf32>
    %c1_106 = arith.constant 1 : index
    %c0_107 = arith.constant 0 : index
    %c37_108 = arith.constant 37 : index
    %130 = vector.load %arg1[%c1_106, %c0_107, %c37_108] : memref<2x8x326xbf16, #tpu.memory_space<vmem>>, vector<1x8x288xbf16>
    %131 = vector.shape_cast %130 : vector<1x8x288xbf16> to vector<8x288xbf16>
    %c7_109 = arith.constant 7 : index
    %c0_110 = arith.constant 0 : index
    %c0_111 = arith.constant 0 : index
    %132 = vector.load %arg2[%c7_109, %c0_110, %c0_111] : memref<9x8x8xbf16, #tpu.memory_space<vmem>>, vector<1x8x8xbf16>
    %133 = vector.shape_cast %132 : vector<1x8x8xbf16> to vector<8x8xbf16>
    %cst_112 = arith.constant dense<0.000000e+00> : vector<8x288xf32>
    %134 = tpu.matmul %133, %131, %cst_112 {dimension_numbers = #tpu.dot_dimension_numbers<[1], [0], [0], [1], [0, 0, 1, 1], [], []>} : vector<8x8xbf16>, vector<8x288xbf16>, vector<8x288xf32> -> vector<8x288xf32>
    %135 = arith.addf %129, %134 : vector<8x288xf32>
    %c1_113 = arith.constant 1 : index
    %c0_114 = arith.constant 0 : index
    %c38_115 = arith.constant 38 : index
    %136 = vector.load %arg1[%c1_113, %c0_114, %c38_115] : memref<2x8x326xbf16, #tpu.memory_space<vmem>>, vector<1x8x288xbf16>
    %137 = vector.shape_cast %136 : vector<1x8x288xbf16> to vector<8x288xbf16>
    %c8_116 = arith.constant 8 : index
    %c0_117 = arith.constant 0 : index
    %c0_118 = arith.constant 0 : index
    %138 = vector.load %arg2[%c8_116, %c0_117, %c0_118] : memref<9x8x8xbf16, #tpu.memory_space<vmem>>, vector<1x8x8xbf16>
    %139 = vector.shape_cast %138 : vector<1x8x8xbf16> to vector<8x8xbf16>
    %cst_119 = arith.constant dense<0.000000e+00> : vector<8x288xf32>
    %140 = tpu.matmul %139, %137, %cst_119 {dimension_numbers = #tpu.dot_dimension_numbers<[1], [0], [0], [1], [0, 0, 1, 1], [], []>} : vector<8x8xbf16>, vector<8x288xbf16>, vector<8x288xf32> -> vector<8x288xf32>
    %141 = arith.addf %135, %140 : vector<8x288xf32>
    %142 = arith.truncf %141 : vector<8x288xf32> to vector<8x288xbf16>
    %c1_120 = arith.constant 1 : index
    %c0_121 = arith.constant 0 : index
    %c0_122 = arith.constant 0 : index
    %143 = vector.load %arg3[%c1_120, %c0_121, %c0_122] : memref<2x8x288xbf16, #tpu.memory_space<vmem>>, vector<1x8x288xbf16>
    %144 = vector.shape_cast %143 : vector<1x8x288xbf16> to vector<8x288xbf16>
    %145 = vector.shape_cast %142 : vector<8x288xbf16> to vector<1x8x288xbf16>
    tpu.vector_store %arg3[%c1_120, %c0_121, %c0_122], %145 {strides = array<i32>} : memref<2x8x288xbf16, #tpu.memory_space<vmem>>, vector<1x8x288xbf16>,
    %146 = vector.broadcast %20 : vector<1x288xf32> to vector<8x288xf32>
    %147 = arith.mulf %141, %146 : vector<8x288xf32>
    %cst_123 = arith.constant dense<0.000000e+00> : vector<8xf32>
    %148 = vector.multi_reduction <add>, %147, %cst_123 [1] : vector<8x288xf32> to vector<8xf32>
    %149 = vector.shape_cast %148 : vector<8xf32> to vector<8x1xf32>
    %150 = arith.addf %84, %149 : vector<8x1xf32>
    %151 = arith.mulf %147, %141 : vector<8x288xf32>
    %cst_124 = arith.constant dense<0.000000e+00> : vector<8xf32>
    %152 = vector.multi_reduction <add>, %151, %cst_124 [1] : vector<8x288xf32> to vector<8xf32>
    %153 = vector.shape_cast %152 : vector<8xf32> to vector<8x1xf32>
    %154 = arith.addf %88, %153 : vector<8x1xf32>
    %c0_125 = arith.constant 0 : index
    %c0_126 = arith.constant 0 : index
    %c0_127 = arith.constant 0 : index
    %155 = vector.load %arg4[%c0_125, %c0_126, %c0_127] : memref<1x8x1xf32, #tpu.memory_space<vmem>>, vector<1x8x1xf32>
    %156 = vector.shape_cast %155 : vector<1x8x1xf32> to vector<8x1xf32>
    %157 = vector.shape_cast %150 : vector<8x1xf32> to vector<1x8x1xf32>
    tpu.vector_store %arg4[%c0_125, %c0_126, %c0_127], %157 {strides = array<i32>} : memref<1x8x1xf32, #tpu.memory_space<vmem>>, vector<1x8x1xf32>,
    %c0_128 = arith.constant 0 : index
    %c0_129 = arith.constant 0 : index
    %c0_130 = arith.constant 0 : index
    %158 = vector.load %arg5[%c0_128, %c0_129, %c0_130] : memref<1x8x1xf32, #tpu.memory_space<vmem>>, vector<1x8x1xf32>
    %159 = vector.shape_cast %158 : vector<1x8x1xf32> to vector<8x1xf32>
    %160 = vector.shape_cast %154 : vector<8x1xf32> to vector<1x8x1xf32>
    tpu.vector_store %arg5[%c0_128, %c0_129, %c0_130], %160 {strides = array<i32>} : memref<1x8x1xf32, #tpu.memory_space<vmem>>, vector<1x8x1xf32>,
    return
  }
  func.func @transform_0(%arg0: i32) -> (i32, i32, i32) {
    %c0_i32 = arith.constant 0 : i32
    %c0_i32_0 = arith.constant 0 : i32
    %c0_i32_1 = arith.constant 0 : i32
    return %arg0, %c0_i32, %c0_i32_0 : i32, i32, i32
  }
  func.func @transform_1(%arg0: i32) -> (i32, i32, i32) {
    %c0_i32 = arith.constant 0 : i32
    %c0_i32_0 = arith.constant 0 : i32
    %c0_i32_1 = arith.constant 0 : i32
    %c0_i32_2 = arith.constant 0 : i32
    return %c0_i32, %c0_i32_0, %c0_i32_1 : i32, i32, i32
  }
  func.func @transform_2(%arg0: i32) -> (i32, i32, i32) {
    %c0_i32 = arith.constant 0 : i32
    %c0_i32_0 = arith.constant 0 : i32
    %c0_i32_1 = arith.constant 0 : i32
    return %arg0, %c0_i32, %c0_i32_0 : i32, i32, i32
  }
  func.func @transform_3(%arg0: i32) -> (i32, i32, i32) {
    %c0_i32 = arith.constant 0 : i32
    %c0_i32_0 = arith.constant 0 : i32
    %c0_i32_1 = arith.constant 0 : i32
    return %arg0, %c0_i32, %c0_i32_0 : i32, i32, i32
  }
  func.func @transform_4(%arg0: i32) -> (i32, i32, i32) {
    %c0_i32 = arith.constant 0 : i32
    %c0_i32_0 = arith.constant 0 : i32
    %c0_i32_1 = arith.constant 0 : i32
    return %arg0, %c0_i32, %c0_i32_0 : i32, i32, i32
  }
}

module attributes {stable_mosaic.version = 11 : i64} {
  func.func @_bn_relu_kernel(%arg0: i32, %arg1: memref<2x8x288xbf16, #tpu.memory_space<vmem>>, %arg2: memref<8x1xf32, #tpu.memory_space<vmem>>, %arg3: memref<8x1xf32, #tpu.memory_space<vmem>>, %arg4: memref<2x8x288xf32, #tpu.memory_space<vmem>>) attributes {dimension_semantics = [#tpu.dimension_semantics<parallel>], iteration_bounds = array<i64: 1>, scalar_prefetch = 0 : i64, scratch_operands = 0 : i64, tpu.core_type = #tpu.core_type<tc>, window_params = [{transform_indices = @transform_0, window_bounds = array<i64: 2, 8, 288>}, {pipeline_mode = #tpu.pipeline_mode<synchronous>, transform_indices = @transform_1, window_bounds = array<i64: 8, 1>}, {pipeline_mode = #tpu.pipeline_mode<synchronous>, transform_indices = @transform_2, window_bounds = array<i64: 8, 1>}, {transform_indices = @transform_3, window_bounds = array<i64: 2, 8, 288>}]} {
    %c0 = arith.constant 0 : index
    %c0_0 = arith.constant 0 : index
    %c0_1 = arith.constant 0 : index
    %0 = vector.load %arg1[%c0, %c0_0, %c0_1] : memref<2x8x288xbf16, #tpu.memory_space<vmem>>, vector<2x8x288xbf16>
    %1 = arith.extf %0 : vector<2x8x288xbf16> to vector<2x8x288xf32>
    %c0_2 = arith.constant 0 : index
    %c0_3 = arith.constant 0 : index
    %2 = vector.load %arg2[%c0_2, %c0_3] : memref<8x1xf32, #tpu.memory_space<vmem>>, vector<8x1xf32>
    %3 = vector.shape_cast %2 : vector<8x1xf32> to vector<1x8x1xf32>
    %4 = vector.broadcast %3 : vector<1x8x1xf32> to vector<2x8x288xf32>
    %5 = arith.mulf %1, %4 : vector<2x8x288xf32>
    %c0_4 = arith.constant 0 : index
    %c0_5 = arith.constant 0 : index
    %6 = vector.load %arg3[%c0_4, %c0_5] : memref<8x1xf32, #tpu.memory_space<vmem>>, vector<8x1xf32>
    %7 = vector.shape_cast %6 : vector<8x1xf32> to vector<1x8x1xf32>
    %8 = vector.broadcast %7 : vector<1x8x1xf32> to vector<2x8x288xf32>
    %9 = arith.addf %5, %8 : vector<2x8x288xf32>
    %cst = arith.constant 0.000000e+00 : f32
    %10 = vector.broadcast %cst : f32 to vector<2x8x288xf32>
    %11 = arith.maximumf %9, %10 : vector<2x8x288xf32>
    %c0_6 = arith.constant 0 : index
    %c0_7 = arith.constant 0 : index
    %c0_8 = arith.constant 0 : index
    %12 = vector.load %arg4[%c0_6, %c0_7, %c0_8] : memref<2x8x288xf32, #tpu.memory_space<vmem>>, vector<2x8x288xf32>
    tpu.vector_store %arg4[%c0_6, %c0_7, %c0_8], %11 {strides = array<i32>} : memref<2x8x288xf32, #tpu.memory_space<vmem>>, vector<2x8x288xf32>,
    return
  }
  func.func @transform_0(%arg0: i32) -> (i32, i32, i32) {
    %c0_i32 = arith.constant 0 : i32
    %c0_i32_0 = arith.constant 0 : i32
    %c0_i32_1 = arith.constant 0 : i32
    return %arg0, %c0_i32, %c0_i32_0 : i32, i32, i32
  }
  func.func @transform_1(%arg0: i32) -> (i32, i32) {
    %c0_i32 = arith.constant 0 : i32
    %c0_i32_0 = arith.constant 0 : i32
    %c0_i32_1 = arith.constant 0 : i32
    return %c0_i32, %c0_i32_0 : i32, i32
  }
  func.func @transform_2(%arg0: i32) -> (i32, i32) {
    %c0_i32 = arith.constant 0 : i32
    %c0_i32_0 = arith.constant 0 : i32
    %c0_i32_1 = arith.constant 0 : i32
    return %c0_i32, %c0_i32_0 : i32, i32
  }
  func.func @transform_3(%arg0: i32) -> (i32, i32, i32) {
    %c0_i32 = arith.constant 0 : i32
    %c0_i32_0 = arith.constant 0 : i32
    %c0_i32_1 = arith.constant 0 : i32
    return %arg0, %c0_i32, %c0_i32_0 : i32, i32, i32
  }
}

</mosaic_0001>

<llo_original>
// kernel: conv_block_forward.3
$region0: #{conv_block_forward.3}
  #allocation0 [shape = 'u32[]', space=smem, size = 0x4, offset = 0x4, fixed_abs, tag = 'smem constant byte address 0x4 - core index']
  #allocation1 [shape = 'u32[144,128]{1,0:T(1,128)}', space=vmem, size = 0x12000, scoped, tag = 'internal scratch']
  %s0 = inlined_call_operand.vmem [shape: bf16[2,8,288], index: 0, kind: input, shape index: {}]
  %s1 = inlined_call_operand.vmem [shape: f32[8,1], index: 1, kind: input, shape index: {}]
  %s2 = inlined_call_operand.vmem [shape: f32[8,1], index: 2, kind: input, shape index: {}]
  %s3 = inlined_call_operand.vmem [shape: f32[2,8,288], index: 3, kind: output, shape index: {}]
  %s4 = sld [smem:[#allocation0]]
  $region22: #{conv_block_forward.3} parent=0
    _
  %s6 = ssub.s32 1, %s4
  %s7 = scalar_select 0, %s6, %s4
  // Predicated region
  $region2: #{conv_block_forward.3} parent=0 // pred_check
    _
  $region3: #{conv_block_forward.3} parent=0 // pred_check_branch
    %9 = sbr.rel (0) target = $region5
  $region4: #{conv_block_forward.3} parent=0 // pred_region
    _
  $region5: #{conv_block_forward.3} parent=0 // pred_fallthru
    _
  // Predicated region
  $region6: #{conv_block_forward.3} parent=0 // pred_check
    _
  $region7: #{conv_block_forward.3} parent=0 // pred_check_branch
    %11 = sbr.rel (0) target = $region9
  $region8: #{conv_block_forward.3} parent=0 // pred_region
    _
  $region9: #{conv_block_forward.3} parent=0 // pred_fallthru
    _
  // Predicated region
  $region10: #{conv_block_forward.3} parent=0 // pred_check
    _
  $region11: #{conv_block_forward.3} parent=0 // pred_check_branch
    %13 = sbr.rel (0) target = $region13
  $region12: #{conv_block_forward.3} parent=0 // pred_region
    _
  $region13: #{conv_block_forward.3} parent=0 // pred_fallthru
    _
  %v14 = vld [vmem:[%s0] sm:$0xff]
  %v15 = vld [vmem:[%s0 + $0x8] sm:$0xf]
  %v16 = vld [vmem:[%s0 + $0xc] sm:$0xff]
  %v17 = vld [vmem:[%s0 + $0x14] sm:$0xf]
  %v18 = vunpack.c.l.bf16 %v14
  %v19 = vunpack.c.h.bf16 %v14
  %v20 = vunpack.c.l.bf16 %v15
  %v21 = vunpack.c.l.bf16 %v16
  %v22 = vunpack.c.h.bf16 %v16
  %v23 = vunpack.c.l.bf16 %v17
  %v24 = vld [vmem:[%s1] sm:$0xff]
  %26 = vset.pattern.permute.xlu0 0
  %27 = vperm.xlu0 %26, %v24
  %v28 = vpop.permute.xlu0 %27
  %v30 = vmul.f32 %v18, %v28
  %v31 = vmul.f32 %v19, %v28
  %v32 = vmul.f32 %v20, %v28
  %v33 = vmul.f32 %v21, %v28
  %v34 = vmul.f32 %v22, %v28
  %v35 = vmul.f32 %v23, %v28
  %v36 = vld [vmem:[%s2] sm:$0xff]
  %38 = vset.pattern.permute.xlu0 0
  %39 = vperm.xlu0 %38, %v36
  %v40 = vpop.permute.xlu0 %39
  %v42 = vadd.f32 %v30, %v40
  %v43 = vadd.f32 %v31, %v40
  %v44 = vadd.f32 %v32, %v40
  %v45 = vadd.f32 %v33, %v40
  %v46 = vadd.f32 %v34, %v40
  %v47 = vadd.f32 %v35, %v40
  %v48 = vmax.f32 %v42, 0.0
  %v49 = vmax.f32 %v43, 0.0
  %v50 = vmax.f32 %v44, 0.0
  %v51 = vmax.f32 %v45, 0.0
  %v52 = vmax.f32 %v46, 0.0
  %v53 = vmax.f32 %v47, 0.0
  %54 = vst [vmem:[%s3] sm:$0xff] %v48
  %55 = vst [vmem:[%s3 + $0x8] sm:$0xff] %v49
  %vm56 = vcmask 261120
  %57 = vst.msk [vmem:[%s3 + $0x10] sm:$0xff] %vm56, %v50
  %58 = vst [vmem:[%s3 + $0x18] sm:$0xff] %v51
  %59 = vst [vmem:[%s3 + $0x20] sm:$0xff] %v52
  %60 = vst.msk [vmem:[%s3 + $0x28] sm:$0xff] %vm56, %v53
  // Predicated region
  $region14: #{conv_block_forward.3} parent=0 // pred_check
    _
  $region15: #{conv_block_forward.3} parent=0 // pred_check_branch
    %62 = sbr.rel (0) target = $region17
  $region16: #{conv_block_forward.3} parent=0 // pred_region
    _
  $region17: #{conv_block_forward.3} parent=0 // pred_fallthru
    _
  // Predicated region
  $region18: #{conv_block_forward.3} parent=0 // pred_check
    _
  $region19: #{conv_block_forward.3} parent=0 // pred_check_branch
    %64 = sbr.rel (0) target = $region21
  $region20: #{conv_block_forward.3} parent=0 // pred_region
    _
  $region21: #{conv_block_forward.3} parent=0 // pred_fallthru
    _

// kernel: conv_block_forward.2
$region0: #{conv_block_forward.2}
  #allocation0 [shape = 'u32[]', space=smem, size = 0x4, offset = 0x4, fixed_abs, tag = 'smem constant byte address 0x4 - core index']
  #allocation1 [shape = 'u32[144,128]{1,0:T(1,128)}', space=vmem, size = 0x12000, scoped, tag = 'internal scratch']
  %s0 = inlined_call_operand.vmem [shape: bf16[2,8,326], index: 0, kind: input, shape index: {}]
  %s1 = inlined_call_operand.vmem [shape: bf16[9,8,8], index: 1, kind: input, shape index: {}]
  %s2 = inlined_call_operand.vmem [shape: bf16[2,8,288], index: 2, kind: output, shape index: {0}]
  %s3 = inlined_call_operand.vmem [shape: f32[1,8,1], index: 3, kind: output, shape index: {1}]
  %s4 = inlined_call_operand.vmem [shape: f32[1,8,1], index: 4, kind: output, shape index: {2}]
  %5 = xla_tuple %s2, %s3, %s4
  %s6 = sld [smem:[#allocation0]]
  $region34: #{conv_block_forward.2} parent=0
    _
  %s8 = ssub.s32 1, %s6
  %s9 = scalar_select 0, %s8, %s6
  // Predicated region
  $region2: #{conv_block_forward.2} parent=0 // pred_check
    _
  $region3: #{conv_block_forward.2} parent=0 // pred_check_branch
    %11 = sbr.rel (0) target = $region5
  $region4: #{conv_block_forward.2} parent=0 // pred_region
    _
  $region5: #{conv_block_forward.2} parent=0 // pred_fallthru
    _
  // Predicated region
  $region6: #{conv_block_forward.2} parent=0 // pred_check
    _
  $region7: #{conv_block_forward.2} parent=0 // pred_check_branch
    %13 = sbr.rel (0) target = $region9
  $region8: #{conv_block_forward.2} parent=0 // pred_region
    _
  $region9: #{conv_block_forward.2} parent=0 // pred_fallthru
    _
  %v15 = vlaneseq
  %v16 = vand.u32 %v15, 127
  %v17 = vadd.s32 %v16, 128
  %v18 = vadd.s32 %v16, 256
  %vm19 = vcmp.lt.s32.totalorder %v16, 0
  %v20 = vsub.s32 0, %v16
  %v21 = vsel %vm19, %v20, %v16
  %v22 = vmul.u32.u64.compose %v21, 3817748708
  %v23 = vextract.low.u32 %v22
  %v24 = vextract.high.u32 %v22
  %v25 = vshrl.u32 %v24, 4
  %v26 = vmul.u32 %v25, 18
  %v27 = vsub.s32 %v21, %v26
  %v28 = vsub.s32 0, %v27
  %v29 = vsel %vm19, %v28, %v27
  %vm30 = vcmp.lt.s32.totalorder %v17, 0
  %v31 = vsub.s32 0, %v17
  %v32 = vsel %vm30, %v31, %v17
  %v33 = vmul.u32.u64.compose %v32, 3817748708
  %v34 = vextract.low.u32 %v33
  %v35 = vextract.high.u32 %v33
  %v36 = vshrl.u32 %v35, 4
  %v37 = vmul.u32 %v36, 18
  %v38 = vsub.s32 %v32, %v37
  %v39 = vsub.s32 0, %v38
  %v40 = vsel %vm30, %v39, %v38
  %vm41 = vcmp.lt.s32.totalorder %v18, 0
  %v42 = vsub.s32 0, %v18
  %v43 = vsel %vm41, %v42, %v18
  %v44 = vmul.u32.u64.compose %v43, 3817748708
  %v45 = vextract.low.u32 %v44
  %v46 = vextract.high.u32 %v44
  %v47 = vshrl.u32 %v46, 4
  %v48 = vmul.u32 %v47, 18
  %v49 = vsub.s32 %v43, %v48
  %v50 = vsub.s32 0, %v49
  %v51 = vsel %vm41, %v50, %v49
  %vm52 = vcmp.ne.s32.totalorder %v29, 0
  %vm53 = vcmp.ne.s32.totalorder %v40, 0
  %vm54 = vcmp.ne.s32.totalorder %v51, 0
  %vm55 = vcmp.lt.s32.totalorder %v29, 0
  %vm56 = vcmp.lt.s32.totalorder %v40, 0
  %vm57 = vcmp.lt.s32.totalorder %v51, 0
  %vm58 = vmand %vm55, %vm52
  %vm59 = vmand %vm56, %vm53
  %vm60 = vmand %vm57, %vm54
  %v61 = vadd.s32 %v29, 18
  %v62 = vadd.s32 %v40, 18
  %v63 = vadd.s32 %v51, 18
  %v64 = vsel %vm58, %v61, %v29
  %v65 = vsel %vm59, %v62, %v40
  %v66 = vsel %vm60, %v63, %v51
  %vm67 = vcmp.lt.s32.totalorder %v64, 16
  %vm68 = vcmp.lt.s32.totalorder %v65, 16
  %vm69 = vcmp.lt.s32.totalorder %v66, 16
  %v70 = vsel %vm67, 1, 0
  %v71 = vsel %vm68, 1, 0
  %v72 = vsel %vm69, 1, 0
  %v73 = vcvt.s32.f32 %v70
  %v74 = vcvt.s32.f32 %v71
  %v75 = vcvt.s32.f32 %v72
  %v76 = vld [vmem:[%s0] sm:$0xff]
  %v77 = vld [vmem:[%s0 + $0x8] sm:$0xf]
  %v78 = vld [vmem:[%s1] sm:$0xf]
  %s79 = scalar_lea.vmem %s1, 4
  %v80 = vld [vmem:[%s79] sm:$0xf]
  %v83 = vunpack.c.l.b16 %v76
  %v84 = vunpack.c.h.b16 %v76
  %v85 = vunpack.c.l.b16 %v77
  %v86 = vpack.c.b16 %v83, %v83
  %v87 = vpack.c.b16 %v84, %v84
  %v88 = vpack.c.b16 %v85, %v85
  %89 = vrot.lane.b32.xlu0 %v86, 127
  %v90 = vpop.permute.xlu0 %89
  %91 = vrot.lane.b32.xlu0 %v87, 127
  %v92 = vpop.permute.xlu0 %91
  %93 = vrot.lane.b32.xlu0 %v88, 127
  %v94 = vpop.permute.xlu0 %93
  %vm95 = vcmask 1039360
  %v96 = vsel %vm95, %v90, %v92
  %v97 = vsel %vm95, %v92, %v94
  %vm98 = vcmask 64512
  %v100 = vsel %vm98, %v80, 0
  %vm102 = vcmask 1043456
  %v104 = vsel %vm102, %v96, 0
  %v107 = vsel %vm102, %v97, 0
  %v110 = vsel %vm102, %v94, 0
  %112 = vmatprep.subr.bf16.mxu0 0
  %113 = vmatpush1.bf16.msra.mxu0 0
  %114 = vmatprep.subr.bf16.mxu0 0
  %115 = vmatpush1.bf16.msra.mxu0 0
  %116 = vmatprep.subr.bf16.mxu0 0
  %117 = vmatpush1.bf16.msra.mxu0 0
  %118 = vmatprep.subr.bf16.mxu0 0
  %119 = vmatpush1.bf16.msra.mxu0 0
  %120 = vmatprep.subr.bf16.mxu0 0
  %121 = vmatpush1.bf16.msra.mxu0 0
  %122 = vmatprep.subr.bf16.mxu0 0
  %123 = vmatpush1.bf16.msra.mxu0 0
  %124 = vmatprep.subr.bf16.mxu0 0
  %125 = vmatpush1.bf16.msra.mxu0 0
  %126 = vmatprep.subr.bf16.mxu0 %v107
  %127 = vmatpush1.bf16.msra.mxu0 %v104
  %128 = vmatprep.subr.bf16.mxu0 0
  %129 = vmatpush2.bf16.msra.mxu0 0
  %130 = vmatprep.subr.bf16.mxu0 0
  %131 = vmatpush2.bf16.msra.mxu0 0
  %132 = vmatprep.subr.bf16.mxu0 0
  %133 = vmatpush2.bf16.msra.mxu0 0
  %134 = vmatprep.subr.bf16.mxu0 0
  %135 = vmatpush2.bf16.msra.mxu0 0
  %136 = vmatprep.subr.bf16.mxu0 0
  %137 = vmatpush2.bf16.msra.mxu0 0
  %138 = vmatprep.subr.bf16.mxu0 0
  %139 = vmatpush2.bf16.msra.mxu0 0
  %140 = vmatprep.subr.bf16.mxu0 0
  %141 = vmatpush2.bf16.msra.mxu0 0
  %142 = vmatprep.subr.bf16.mxu0 0
  %143 = vmatpush2.bf16.msra.mxu0 0
  %144 = vmatprep.mubr.bf16.mxu0 0
  %145 = vmatmul.mubr.bf16.gmra.mxu0 %v100
  %v146 = vpop.f32.mrf.mxu0
  %v147 = vadd.f32 0.0, %v146
  %v148 = vpop.f32.mrf.mxu0
  %v149 = vadd.f32 0.0, %v148
  %v150 = vpop.f32.mrf.mxu0
  %v151 = vpop.f32.mrf.mxu0
  %152 = vdwg.mxu0
  %153 = vmatprep.subr.bf16.mxu0 0
  %154 = vmatpush1.bf16.msra.mxu0 0
  %155 = vmatprep.subr.bf16.mxu0 0
  %156 = vmatpush1.bf16.msra.mxu0 0
  %157 = vmatprep.subr.bf16.mxu0 0
  %158 = vmatpush1.bf16.msra.mxu0 0
  %159 = vmatprep.subr.bf16.mxu0 0
  %160 = vmatpush1.bf16.msra.mxu0 0
  %161 = vmatprep.subr.bf16.mxu0 0
  %162 = vmatpush1.bf16.msra.mxu0 0
  %163 = vmatprep.subr.bf16.mxu0 0
  %164 = vmatpush1.bf16.msra.mxu0 0
  %165 = vmatprep.subr.bf16.mxu0 0
  %166 = vmatpush1.bf16.msra.mxu0 0
  %167 = vmatprep.subr.bf16.mxu0 0
  %168 = vmatpush1.bf16.msra.mxu0 %v110
  %169 = vmatprep.subr.bf16.mxu0 0
  %170 = vmatpush2.bf16.msra.mxu0 0
  %171 = vmatprep.subr.bf16.mxu0 0
  %172 = vmatpush2.bf16.msra.mxu0 0
  %173 = vmatprep.subr.bf16.mxu0 0
  %174 = vmatpush2.bf16.msra.mxu0 0
  %175 = vmatprep.subr.bf16.mxu0 0
  %176 = vmatpush2.bf16.msra.mxu0 0
  %177 = vmatprep.subr.bf16.mxu0 0
  %178 = vmatpush2.bf16.msra.mxu0 0
  %179 = vmatprep.subr.bf16.mxu0 0
  %180 = vmatpush2.bf16.msra.mxu0 0
  %181 = vmatprep.subr.bf16.mxu0 0
  %182 = vmatpush2.bf16.msra.mxu0 0
  %183 = vmatprep.subr.bf16.mxu0 0
  %184 = vmatpush2.bf16.msra.mxu0 0
  %185 = vmatprep.mubr.bf16.mxu0 0
  %186 = vmatmul.mubr.bf16.gmra.mxu0 %v100
  %v187 = vpop.f32.mrf.mxu0
  %v188 = vadd.f32 0.0, %v187
  %v189 = vpop.f32.mrf.mxu0
  %v190 = vpop.f32.mrf.mxu0
  %v191 = vpop.f32.mrf.mxu0
  %192 = vdwg.mxu0
  %v194 = vsel %vm98, %v78, 0
  %v197 = vsel %vm102, %v86, 0
  %v200 = vsel %vm102, %v87, 0
  %v203 = vsel %vm102, %v88, 0
  %205 = vmatprep.subr.bf16.mxu0 0
  %206 = vmatpush1.bf16.msra.mxu0 0
  %207 = vmatprep.subr.bf16.mxu0 0
  %208 = vmatpush1.bf16.msra.mxu0 0
  %209 = vmatprep.subr.bf16.mxu0 0
  %210 = vmatpush1.bf16.msra.mxu0 0
  %211 = vmatprep.subr.bf16.mxu0 0
  %212 = vmatpush1.bf16.msra.mxu0 0
  %213 = vmatprep.subr.bf16.mxu0 0
  %214 = vmatpush1.bf16.msra.mxu0 0
  %215 = vmatprep.subr.bf16.mxu0 0
  %216 = vmatpush1.bf16.msra.mxu0 0
  %217 = vmatprep.subr.bf16.mxu0 0
  %218 = vmatpush1.bf16.msra.mxu0 0
  %219 = vmatprep.subr.bf16.mxu0 %v200
  %220 = vmatpush1.bf16.msra.mxu0 %v197
  %221 = vmatprep.subr.bf16.mxu0 0
  %222 = vmatpush2.bf16.msra.mxu0 0
  %223 = vmatprep.subr.bf16.mxu0 0
  %224 = vmatpush2.bf16.msra.mxu0 0
  %225 = vmatprep.subr.bf16.mxu0 0
  %226 = vmatpush2.bf16.msra.mxu0 0
  %227 = vmatprep.subr.bf16.mxu0 0
  %228 = vmatpush2.bf16.msra.mxu0 0
  %229 = vmatprep.subr.bf16.mxu0 0
  %230 = vmatpush2.bf16.msra.mxu0 0
  %231 = vmatprep.subr.bf16.mxu0 0
  %232 = vmatpush2.bf16.msra.mxu0 0
  %233 = vmatprep.subr.bf16.mxu0 0
  %234 = vmatpush2.bf16.msra.mxu0 0
  %235 = vmatprep.subr.bf16.mxu0 0
  %236 = vmatpush2.bf16.msra.mxu0 0
  %237 = vmatprep.mubr.bf16.mxu0 0
  %238 = vmatmul.mubr.bf16.gmra.mxu0 %v194
  %v239 = vpop.f32.mrf.mxu0
  %v240 = vadd.f32 %v147, %v239
  %v241 = vpop.f32.mrf.mxu0
  %v242 = vadd.f32 %v149, %v241
  %v243 = vpop.f32.mrf.mxu0
  %v244 = vpop.f32.mrf.mxu0
  %245 = vdwg.mxu0
  %246 = vmatprep.subr.bf16.mxu0 0
  %247 = vmatpush1.bf16.msra.mxu0 0
  %248 = vmatprep.subr.bf16.mxu0 0
  %249 = vmatpush1.bf16.msra.mxu0 0
  %250 = vmatprep.subr.bf16.mxu0 0
  %251 = vmatpush1.bf16.msra.mxu0 0
  %252 = vmatprep.subr.bf16.mxu0 0
  %253 = vmatpush1.bf16.msra.mxu0 0
  %254 = vmatprep.subr.bf16.mxu0 0
  %255 = vmatpush1.bf16.msra.mxu0 0
  %256 = vmatprep.subr.bf16.mxu0 0
  %257 = vmatpush1.bf16.msra.mxu0 0
  %258 = vmatprep.subr.bf16.mxu0 0
  %259 = vmatpush1.bf16.msra.mxu0 0
  %260 = vmatprep.subr.bf16.mxu0 0
  %261 = vmatpush1.bf16.msra.mxu0 %v203
  %262 = vmatprep.subr.bf16.mxu0 0
  %263 = vmatpush2.bf16.msra.mxu0 0
  %264 = vmatprep.subr.bf16.mxu0 0
  %265 = vmatpush2.bf16.msra.mxu0 0
  %266 = vmatprep.subr.bf16.mxu0 0
  %267 = vmatpush2.bf16.msra.mxu0 0
  %268 = vmatprep.subr.bf16.mxu0 0
  %269 = vmatpush2.bf16.msra.mxu0 0
  %270 = vmatprep.subr.bf16.mxu0 0
  %271 = vmatpush2.bf16.msra.mxu0 0
  %272 = vmatprep.subr.bf16.mxu0 0
  %273 = vmatpush2.bf16.msra.mxu0 0
  %274 = vmatprep.subr.bf16.mxu0 0
  %275 = vmatpush2.bf16.msra.mxu0 0
  %276 = vmatprep.subr.bf16.mxu0 0
  %277 = vmatpush2.bf16.msra.mxu0 0
  %278 = vmatprep.mubr.bf16.mxu0 0
  %279 = vmatmul.mubr.bf16.gmra.mxu0 %v194
  %v280 = vpop.f32.mrf.mxu0
  %v281 = vadd.f32 %v188, %v280
  %v282 = vpop.f32.mrf.mxu0
  %v283 = vpop.f32.mrf.mxu0
  %v284 = vpop.f32.mrf.mxu0
  %285 = vdwg.mxu0
  %s286 = scalar_lea.vmem %s1, 8
  %v287 = vld [vmem:[%s286] sm:$0xf]
  %288 = vrot.lane.b32.xlu0 %v86, 126
  %v289 = vpop.permute.xlu0 %288
  %290 = vrot.lane.b32.xlu0 %v87, 126
  %v291 = vpop.permute.xlu0 %290
  %292 = vrot.lane.b32.xlu0 %v88, 126
  %v293 = vpop.permute.xlu0 %292
  %vm294 = vcmask 1031168
  %v295 = vsel %vm294, %v289, %v291
  %v296 = vsel %vm294, %v291, %v293
  %v298 = vsel %vm98, %v287, 0
  %v301 = vsel %vm102, %v295, 0
  %v304 = vsel %vm102, %v296, 0
  %v307 = vsel %vm102, %v293, 0
  %309 = vmatprep.subr.bf16.mxu0 0
  %310 = vmatpush1.bf16.msra.mxu0 0
  %311 = vmatprep.subr.bf16.mxu0 0
  %312 = vmatpush1.bf16.msra.mxu0 0
  %313 = vmatprep.subr.bf16.mxu0 0
  %314 = vmatpush1.bf16.msra.mxu0 0
  %315 = vmatprep.subr.bf16.mxu0 0
  %316 = vmatpush1.bf16.msra.mxu0 0
  %317 = vmatprep.subr.bf16.mxu0 0
  %318 = vmatpush1.bf16.msra.mxu0 0
  %319 = vmatprep.subr.bf16.mxu0 0
  %320 = vmatpush1.bf16.msra.mxu0 0
  %321 = vmatprep.subr.bf16.mxu0 0
  %322 = vmatpush1.bf16.msra.mxu0 0
  %323 = vmatprep.subr.bf16.mxu0 %v304
  %324 = vmatpush1.bf16.msra.mxu0 %v301
  %325 = vmatprep.subr.bf16.mxu0 0
  %326 = vmatpush2.bf16.msra.mxu0 0
  %327 = vmatprep.subr.bf16.mxu0 0
  %328 = vmatpush2.bf16.msra.mxu0 0
  %329 = vmatprep.subr.bf16.mxu0 0
  %330 = vmatpush2.bf16.msra.mxu0 0
  %331 = vmatprep.subr.bf16.mxu0 0
  %332 = vmatpush2.bf16.msra.mxu0 0
  %333 = vmatprep.subr.bf16.mxu0 0
  %334 = vmatpush2.bf16.msra.mxu0 0
  %335 = vmatprep.subr.bf16.mxu0 0
  %336 = vmatpush2.bf16.msra.mxu0 0
  %337 = vmatprep.subr.bf16.mxu0 0
  %338 = vmatpush2.bf16.msra.mxu0 0
  %339 = vmatprep.subr.bf16.mxu0 0
  %340 = vmatpush2.bf16.msra.mxu0 0
  %341 = vmatprep.mubr.bf16.mxu0 0
  %342 = vmatmul.mubr.bf16.gmra.mxu0 %v298
  %v343 = vpop.f32.mrf.mxu0
  %v344 = vadd.f32 0.0, %v343
  %v345 = vpop.f32.mrf.mxu0
  %v346 = vadd.f32 0.0, %v345
  %v347 = vpop.f32.mrf.mxu0
  %v348 = vpop.f32.mrf.mxu0
  %349 = vdwg.mxu0
  %350 = vmatprep.subr.bf16.mxu0 0
  %351 = vmatpush1.bf16.msra.mxu0 0
  %352 = vmatprep.subr.bf16.mxu0 0
  %353 = vmatpush1.bf16.msra.mxu0 0
  %354 = vmatprep.subr.bf16.mxu0 0
  %355 = vmatpush1.bf16.msra.mxu0 0
  %356 = vmatprep.subr.bf16.mxu0 0
  %357 = vmatpush1.bf16.msra.mxu0 0
  %358 = vmatprep.subr.bf16.mxu0 0
  %359 = vmatpush1.bf16.msra.mxu0 0
  %360 = vmatprep.subr.bf16.mxu0 0
  %361 = vmatpush1.bf16.msra.mxu0 0
  %362 = vmatprep.subr.bf16.mxu0 0
  %363 = vmatpush1.bf16.msra.mxu0 0
  %364 = vmatprep.subr.bf16.mxu0 0
  %365 = vmatpush1.bf16.msra.mxu0 %v307
  %366 = vmatprep.subr.bf16.mxu0 0
  %367 = vmatpush2.bf16.msra.mxu0 0
  %368 = vmatprep.subr.bf16.mxu0 0
  %369 = vmatpush2.bf16.msra.mxu0 0
  %370 = vmatprep.subr.bf16.mxu0 0
  %371 = vmatpush2.bf16.msra.mxu0 0
  %372 = vmatprep.subr.bf16.mxu0 0
  %373 = vmatpush2.bf16.msra.mxu0 0
  %374 = vmatprep.subr.bf16.mxu0 0
  %375 = vmatpush2.bf16.msra.mxu0 0
  %376 = vmatprep.subr.bf16.mxu0 0
  %377 = vmatpush2.bf16.msra.mxu0 0
  %378 = vmatprep.subr.bf16.mxu0 0
  %379 = vmatpush2.bf16.msra.mxu0 0
  %380 = vmatprep.subr.bf16.mxu0 0
  %381 = vmatpush2.bf16.msra.mxu0 0
  %382 = vmatprep.mubr.bf16.mxu0 0
  %383 = vmatmul.mubr.bf16.gmra.mxu0 %v298
  %v384 = vpop.f32.mrf.mxu0
  %v385 = vadd.f32 0.0, %v384
  %v386 = vpop.f32.mrf.mxu0
  %v387 = vpop.f32.mrf.mxu0
  %v388 = vpop.f32.mrf.mxu0
  %389 = vdwg.mxu0
  %v390 = vadd.f32 %v240, %v344
  %v391 = vadd.f32 %v242, %v346
  %v392 = vadd.f32 %v281, %v385
  %s393 = scalar_lea.vmem %s1, 12
  %v394 = vld [vmem:[%s393] sm:$0xf]
  %395 = vrot.lane.b32.xlu0 %v86, 110
  %v396 = vpop.permute.xlu0 %395
  %397 = vrot.lane.b32.xlu0 %v87, 110
  %v398 = vpop.permute.xlu0 %397
  %399 = vrot.lane.b32.xlu0 %v88, 110
  %v400 = vpop.permute.xlu0 %399
  %vm401 = vcmask 900096
  %v402 = vsel %vm401, %v396, %v398
  %v403 = vsel %vm401, %v398, %v400
  %v405 = vsel %vm98, %v394, 0
  %v408 = vsel %vm102, %v402, 0
  %v411 = vsel %vm102, %v403, 0
  %v414 = vsel %vm102, %v400, 0
  %416 = vmatprep.subr.bf16.mxu0 0
  %417 = vmatpush1.bf16.msra.mxu0 0
  %418 = vmatprep.subr.bf16.mxu0 0
  %419 = vmatpush1.bf16.msra.mxu0 0
  %420 = vmatprep.subr.bf16.mxu0 0
  %421 = vmatpush1.bf16.msra.mxu0 0
  %422 = vmatprep.subr.bf16.mxu0 0
  %423 = vmatpush1.bf16.msra.mxu0 0
  %424 = vmatprep.subr.bf16.mxu0 0
  %425 = vmatpush1.bf16.msra.mxu0 0
  %426 = vmatprep.subr.bf16.mxu0 0
  %427 = vmatpush1.bf16.msra.mxu0 0
  %428 = vmatprep.subr.bf16.mxu0 0
  %429 = vmatpush1.bf16.msra.mxu0 0
  %430 = vmatprep.subr.bf16.mxu0 %v411
  %431 = vmatpush1.bf16.msra.mxu0 %v408
  %432 = vmatprep.subr.bf16.mxu0 0
  %433 = vmatpush2.bf16.msra.mxu0 0
  %434 = vmatprep.subr.bf16.mxu0 0
  %435 = vmatpush2.bf16.msra.mxu0 0
  %436 = vmatprep.subr.bf16.mxu0 0
  %437 = vmatpush2.bf16.msra.mxu0 0
  %438 = vmatprep.subr.bf16.mxu0 0
  %439 = vmatpush2.bf16.msra.mxu0 0
  %440 = vmatprep.subr.bf16.mxu0 0
  %441 = vmatpush2.bf16.msra.mxu0 0
  %442 = vmatprep.subr.bf16.mxu0 0
  %443 = vmatpush2.bf16.msra.mxu0 0
  %444 = vmatprep.subr.bf16.mxu0 0
  %445 = vmatpush2.bf16.msra.mxu0 0
  %446 = vmatprep.subr.bf16.mxu0 0
  %447 = vmatpush2.bf16.msra.mxu0 0
  %448 = vmatprep.mubr.bf16.mxu0 0
  %449 = vmatmul.mubr.bf16.gmra.mxu0 %v405
  %v450 = vpop.f32.mrf.mxu0
  %v451 = vadd.f32 0.0, %v450
  %v452 = vpop.f32.mrf.mxu0
  %v453 = vadd.f32 0.0, %v452
  %v454 = vpop.f32.mrf.mxu0
  %v455 = vpop.f32.mrf.mxu0
  %456 = vdwg.mxu0
  %457 = vmatprep.subr.bf16.mxu0 0
  %458 = vmatpush1.bf16.msra.mxu0 0
  %459 = vmatprep.subr.bf16.mxu0 0
  %460 = vmatpush1.bf16.msra.mxu0 0
  %461 = vmatprep.subr.bf16.mxu0 0
  %462 = vmatpush1.bf16.msra.mxu0 0
  %463 = vmatprep.subr.bf16.mxu0 0
  %464 = vmatpush1.bf16.msra.mxu0 0
  %465 = vmatprep.subr.bf16.mxu0 0
  %466 = vmatpush1.bf16.msra.mxu0 0
  %467 = vmatprep.subr.bf16.mxu0 0
  %468 = vmatpush1.bf16.msra.mxu0 0
  %469 = vmatprep.subr.bf16.mxu0 0
  %470 = vmatpush1.bf16.msra.mxu0 0
  %471 = vmatprep.subr.bf16.mxu0 0
  %472 = vmatpush1.bf16.msra.mxu0 %v414
  %473 = vmatprep.subr.bf16.mxu0 0
  %474 = vmatpush2.bf16.msra.mxu0 0
  %475 = vmatprep.subr.bf16.mxu0 0
  %476 = vmatpush2.bf16.msra.mxu0 0
  %477 = vmatprep.subr.bf16.mxu0 0
  %478 = vmatpush2.bf16.msra.mxu0 0
  %479 = vmatprep.subr.bf16.mxu0 0
  %480 = vmatpush2.bf16.msra.mxu0 0
  %481 = vmatprep.subr.bf16.mxu0 0
  %482 = vmatpush2.bf16.msra.mxu0 0
  %483 = vmatprep.subr.bf16.mxu0 0
  %484 = vmatpush2.bf16.msra.mxu0 0
  %485 = vmatprep.subr.bf16.mxu0 0
  %486 = vmatpush2.bf16.msra.mxu0 0
  %487 = vmatprep.subr.bf16.mxu0 0
  %488 = vmatpush2.bf16.msra.mxu0 0
  %489 = vmatprep.mubr.bf16.mxu0 0
  %490 = vmatmul.mubr.bf16.gmra.mxu0 %v405
  %v491 = vpop.f32.mrf.mxu0
  %v492 = vadd.f32 0.0, %v491
  %v493 = vpop.f32.mrf.mxu0
  %v494 = vpop.f32.mrf.mxu0
  %v495 = vpop.f32.mrf.mxu0
  %496 = vdwg.mxu0
  %v497 = vadd.f32 %v390, %v451
  %v498 = vadd.f32 %v391, %v453
  %v499 = vadd.f32 %v392, %v492
  %s500 = scalar_lea.vmem %s1, 16
  %v501 = vld [vmem:[%s500] sm:$0xf]
  %502 = vrot.lane.b32.xlu0 %v86, 109
  %v503 = vpop.permute.xlu0 %502
  %504 = vrot.lane.b32.xlu0 %v87, 109
  %v505 = vpop.permute.xlu0 %504
  %506 = vrot.lane.b32.xlu0 %v88, 109
  %v507 = vpop.permute.xlu0 %506
  %vm508 = vcmask 891904
  %v509 = vsel %vm508, %v503, %v505
  %v510 = vsel %vm508, %v505, %v507
  %v512 = vsel %vm98, %v501, 0
  %v515 = vsel %vm102, %v509, 0
  %v518 = vsel %vm102, %v510, 0
  %v521 = vsel %vm102, %v507, 0
  %523 = vmatprep.subr.bf16.mxu0 0
  %524 = vmatpush1.bf16.msra.mxu0 0
  %525 = vmatprep.subr.bf16.mxu0 0
  %526 = vmatpush1.bf16.msra.mxu0 0
  %527 = vmatprep.subr.bf16.mxu0 0
  %528 = vmatpush1.bf16.msra.mxu0 0
  %529 = vmatprep.subr.bf16.mxu0 0
  %530 = vmatpush1.bf16.msra.mxu0 0
  %531 = vmatprep.subr.bf16.mxu0 0
  %532 = vmatpush1.bf16.msra.mxu0 0
  %533 = vmatprep.subr.bf16.mxu0 0
  %534 = vmatpush1.bf16.msra.mxu0 0
  %535 = vmatprep.subr.bf16.mxu0 0
  %536 = vmatpush1.bf16.msra.mxu0 0
  %537 = vmatprep.subr.bf16.mxu0 %v518
  %538 = vmatpush1.bf16.msra.mxu0 %v515
  %539 = vmatprep.subr.bf16.mxu0 0
  %540 = vmatpush2.bf16.msra.mxu0 0
  %541 = vmatprep.subr.bf16.mxu0 0
  %542 = vmatpush2.bf16.msra.mxu0 0
  %543 = vmatprep.subr.bf16.mxu0 0
  %544 = vmatpush2.bf16.msra.mxu0 0
  %545 = vmatprep.subr.bf16.mxu0 0
  %546 = vmatpush2.bf16.msra.mxu0 0
  %547 = vmatprep.subr.bf16.mxu0 0
  %548 = vmatpush2.bf16.msra.mxu0 0
  %549 = vmatprep.subr.bf16.mxu0 0
  %550 = vmatpush2.bf16.msra.mxu0 0
  %551 = vmatprep.subr.bf16.mxu0 0
  %552 = vmatpush2.bf16.msra.mxu0 0
  %553 = vmatprep.subr.bf16.mxu0 0
  %554 = vmatpush2.bf16.msra.mxu0 0
  %555 = vmatprep.mubr.bf16.mxu0 0
  %556 = vmatmul.mubr.bf16.gmra.mxu0 %v512
  %v557 = vpop.f32.mrf.mxu0
  %v558 = vadd.f32 0.0, %v557
  %v559 = vpop.f32.mrf.mxu0
  %v560 = vadd.f32 0.0, %v559
  %v561 = vpop.f32.mrf.mxu0
  %v562 = vpop.f32.mrf.mxu0
  %563 = vdwg.mxu0
  %564 = vmatprep.subr.bf16.mxu0 0
  %565 = vmatpush1.bf16.msra.mxu0 0
  %566 = vmatprep.subr.bf16.mxu0 0
  %567 = vmatpush1.bf16.msra.mxu0 0
  %568 = vmatprep.subr.bf16.mxu0 0
  %569 = vmatpush1.bf16.msra.mxu0 0
  %570 = vmatprep.subr.bf16.mxu0 0
  %571 = vmatpush1.bf16.msra.mxu0 0
  %572 = vmatprep.subr.bf16.mxu0 0
  %573 = vmatpush1.bf16.msra.mxu0 0
  %574 = vmatprep.subr.bf16.mxu0 0
  %575 = vmatpush1.bf16.msra.mxu0 0
  %576 = vmatprep.subr.bf16.mxu0 0
  %577 = vmatpush1.bf16.msra.mxu0 0
  %578 = vmatprep.subr.bf16.mxu0 0
  %579 = vmatpush1.bf16.msra.mxu0 %v521
  %580 = vmatprep.subr.bf16.mxu0 0
  %581 = vmatpush2.bf16.msra.mxu0 0
  %582 = vmatprep.subr.bf16.mxu0 0
  %583 = vmatpush2.bf16.msra.mxu0 0
  %584 = vmatprep.subr.bf16.mxu0 0
  %585 = vmatpush2.bf16.msra.mxu0 0
  %586 = vmatprep.subr.bf16.mxu0 0
  %587 = vmatpush2.bf16.msra.mxu0 0
  %588 = vmatprep.subr.bf16.mxu0 0
  %589 = vmatpush2.bf16.msra.mxu0 0
  %590 = vmatprep.subr.bf16.mxu0 0
  %591 = vmatpush2.bf16.msra.mxu0 0
  %592 = vmatprep.subr.bf16.mxu0 0
  %593 = vmatpush2.bf16.msra.mxu0 0
  %594 = vmatprep.subr.bf16.mxu0 0
  %595 = vmatpush2.bf16.msra.mxu0 0
  %596 = vmatprep.mubr.bf16.mxu0 0
  %597 = vmatmul.mubr.bf16.gmra.mxu0 %v512
  %v598 = vpop.f32.mrf.mxu0
  %v599 = vadd.f32 0.0, %v598
  %v600 = vpop.f32.mrf.mxu0
  %v601 = vpop.f32.mrf.mxu0
  %v602 = vpop.f32.mrf.mxu0
  %603 = vdwg.mxu0
  %v604 = vadd.f32 %v497, %v558
  %v605 = vadd.f32 %v498, %v560
  %v606 = vadd.f32 %v499, %v599
  %s607 = scalar_lea.vmem %s1, 20
  %v608 = vld [vmem:[%s607] sm:$0xf]
  %609 = vrot.lane.b32.xlu0 %v86, 108
  %v610 = vpop.permute.xlu0 %609
  %611 = vrot.lane.b32.xlu0 %v87, 108
  %v612 = vpop.permute.xlu0 %611
  %613 = vrot.lane.b32.xlu0 %v88, 108
  %v614 = vpop.permute.xlu0 %613
  %vm615 = vcmask 883712
  %v616 = vsel %vm615, %v610, %v612
  %v617 = vsel %vm615, %v612, %v614
  %v619 = vsel %vm98, %v608, 0
  %v622 = vsel %vm102, %v616, 0
  %v625 = vsel %vm102, %v617, 0
  %v628 = vsel %vm102, %v614, 0
  %630 = vmatprep.subr.bf16.mxu0 0
  %631 = vmatpush1.bf16.msra.mxu0 0
  %632 = vmatprep.subr.bf16.mxu0 0
  %633 = vmatpush1.bf16.msra.mxu0 0
  %634 = vmatprep.subr.bf16.mxu0 0
  %635 = vmatpush1.bf16.msra.mxu0 0
  %636 = vmatprep.subr.bf16.mxu0 0
  %637 = vmatpush1.bf16.msra.mxu0 0
  %638 = vmatprep.subr.bf16.mxu0 0
  %639 = vmatpush1.bf16.msra.mxu0 0
  %640 = vmatprep.subr.bf16.mxu0 0
  %641 = vmatpush1.bf16.msra.mxu0 0
  %642 = vmatprep.subr.bf16.mxu0 0
  %643 = vmatpush1.bf16.msra.mxu0 0
  %644 = vmatprep.subr.bf16.mxu0 %v625
  %645 = vmatpush1.bf16.msra.mxu0 %v622
  %646 = vmatprep.subr.bf16.mxu0 0
  %647 = vmatpush2.bf16.msra.mxu0 0
  %648 = vmatprep.subr.bf16.mxu0 0
  %649 = vmatpush2.bf16.msra.mxu0 0
  %650 = vmatprep.subr.bf16.mxu0 0
  %651 = vmatpush2.bf16.msra.mxu0 0
  %652 = vmatprep.subr.bf16.mxu0 0
  %653 = vmatpush2.bf16.msra.mxu0 0
  %654 = vmatprep.subr.bf16.mxu0 0
  %655 = vmatpush2.bf16.msra.mxu0 0
  %656 = vmatprep.subr.bf16.mxu0 0
  %657 = vmatpush2.bf16.msra.mxu0 0
  %658 = vmatprep.subr.bf16.mxu0 0
  %659 = vmatpush2.bf16.msra.mxu0 0
  %660 = vmatprep.subr.bf16.mxu0 0
  %661 = vmatpush2.bf16.msra.mxu0 0
  %662 = vmatprep.mubr.bf16.mxu0 0
  %663 = vmatmul.mubr.bf16.gmra.mxu0 %v619
  %v664 = vpop.f32.mrf.mxu0
  %v665 = vadd.f32 0.0, %v664
  %v666 = vpop.f32.mrf.mxu0
  %v667 = vadd.f32 0.0, %v666
  %v668 = vpop.f32.mrf.mxu0
  %v669 = vpop.f32.mrf.mxu0
  %670 = vdwg.mxu0
  %671 = vmatprep.subr.bf16.mxu0 0
  %672 = vmatpush1.bf16.msra.mxu0 0
  %673 = vmatprep.subr.bf16.mxu0 0
  %674 = vmatpush1.bf16.msra.mxu0 0
  %675 = vmatprep.subr.bf16.mxu0 0
  %676 = vmatpush1.bf16.msra.mxu0 0
  %677 = vmatprep.subr.bf16.mxu0 0
  %678 = vmatpush1.bf16.msra.mxu0 0
  %679 = vmatprep.subr.bf16.mxu0 0
  %680 = vmatpush1.bf16.msra.mxu0 0
  %681 = vmatprep.subr.bf16.mxu0 0
  %682 = vmatpush1.bf16.msra.mxu0 0
  %683 = vmatprep.subr.bf16.mxu0 0
  %684 = vmatpush1.bf16.msra.mxu0 0
  %685 = vmatprep.subr.bf16.mxu0 0
  %686 = vmatpush1.bf16.msra.mxu0 %v628
  %687 = vmatprep.subr.bf16.mxu0 0
  %688 = vmatpush2.bf16.msra.mxu0 0
  %689 = vmatprep.subr.bf16.mxu0 0
  %690 = vmatpush2.bf16.msra.mxu0 0
  %691 = vmatprep.subr.bf16.mxu0 0
  %692 = vmatpush2.bf16.msra.mxu0 0
  %693 = vmatprep.subr.bf16.mxu0 0
  %694 = vmatpush2.bf16.msra.mxu0 0
  %695 = vmatprep.subr.bf16.mxu0 0
  %696 = vmatpush2.bf16.msra.mxu0 0
  %697 = vmatprep.subr.bf16.mxu0 0
  %698 = vmatpush2.bf16.msra.mxu0 0
  %699 = vmatprep.subr.bf16.mxu0 0
  %700 = vmatpush2.bf16.msra.mxu0 0
  %701 = vmatprep.subr.bf16.mxu0 0
  %702 = vmatpush2.bf16.msra.mxu0 0
  %703 = vmatprep.mubr.bf16.mxu0 0
  %704 = vmatmul.mubr.bf16.gmra.mxu0 %v619
  %v705 = vpop.f32.mrf.mxu0
  %v706 = vadd.f32 0.0, %v705
  %v707 = vpop.f32.mrf.mxu0
  %v708 = vpop.f32.mrf.mxu0
  %v709 = vpop.f32.mrf.mxu0
  %710 = vdwg.mxu0
  %v711 = vadd.f32 %v604, %v665
  %v712 = vadd.f32 %v605, %v667
  %v713 = vadd.f32 %v606, %v706
  %s714 = scalar_lea.vmem %s1, 24
  %v715 = vld [vmem:[%s714] sm:$0xf]
  %716 = vrot.lane.b32.xlu0 %v86, 92
  %v717 = vpop.permute.xlu0 %716
  %718 = vrot.lane.b32.xlu0 %v87, 92
  %v719 = vpop.permute.xlu0 %718
  %720 = vrot.lane.b32.xlu0 %v88, 92
  %v721 = vpop.permute.xlu0 %720
  %vm722 = vcmask 752640
  %v723 = vsel %vm722, %v717, %v719
  %v724 = vsel %vm722, %v719, %v721
  %v726 = vsel %vm98, %v715, 0
  %v729 = vsel %vm102, %v723, 0
  %v732 = vsel %vm102, %v724, 0
  %v735 = vsel %vm102, %v721, 0
  %737 = vmatprep.subr.bf16.mxu0 0
  %738 = vmatpush1.bf16.msra.mxu0 0
  %739 = vmatprep.subr.bf16.mxu0 0
  %740 = vmatpush1.bf16.msra.mxu0 0
  %741 = vmatprep.subr.bf16.mxu0 0
  %742 = vmatpush1.bf16.msra.mxu0 0
  %743 = vmatprep.subr.bf16.mxu0 0
  %744 = vmatpush1.bf16.msra.mxu0 0
  %745 = vmatprep.subr.bf16.mxu0 0
  %746 = vmatpush1.bf16.msra.mxu0 0
  %747 = vmatprep.subr.bf16.mxu0 0
  %748 = vmatpush1.bf16.msra.mxu0 0
  %749 = vmatprep.subr.bf16.mxu0 0
  %750 = vmatpush1.bf16.msra.mxu0 0
  %751 = vmatprep.subr.bf16.mxu0 %v732
  %752 = vmatpush1.bf16.msra.mxu0 %v729
  %753 = vmatprep.subr.bf16.mxu0 0
  %754 = vmatpush2.bf16.msra.mxu0 0
  %755 = vmatprep.subr.bf16.mxu0 0
  %756 = vmatpush2.bf16.msra.mxu0 0
  %757 = vmatprep.subr.bf16.mxu0 0
  %758 = vmatpush2.bf16.msra.mxu0 0
  %759 = vmatprep.subr.bf16.mxu0 0
  %760 = vmatpush2.bf16.msra.mxu0 0
  %761 = vmatprep.subr.bf16.mxu0 0
  %762 = vmatpush2.bf16.msra.mxu0 0
  %763 = vmatprep.subr.bf16.mxu0 0
  %764 = vmatpush2.bf16.msra.mxu0 0
  %765 = vmatprep.subr.bf16.mxu0 0
  %766 = vmatpush2.bf16.msra.mxu0 0
  %767 = vmatprep.subr.bf16.mxu0 0
  %768 = vmatpush2.bf16.msra.mxu0 0
  %769 = vmatprep.mubr.bf16.mxu0 0
  %770 = vmatmul.mubr.bf16.gmra.mxu0 %v726
  %v771 = vpop.f32.mrf.mxu0
  %v772 = vadd.f32 0.0, %v771
  %v773 = vpop.f32.mrf.mxu0
  %v774 = vadd.f32 0.0, %v773
  %v775 = vpop.f32.mrf.mxu0
  %v776 = vpop.f32.mrf.mxu0
  %777 = vdwg.mxu0
  %778 = vmatprep.subr.bf16.mxu0 0
  %779 = vmatpush1.bf16.msra.mxu0 0
  %780 = vmatprep.subr.bf16.mxu0 0
  %781 = vmatpush1.bf16.msra.mxu0 0
  %782 = vmatprep.subr.bf16.mxu0 0
  %783 = vmatpush1.bf16.msra.mxu0 0
  %784 = vmatprep.subr.bf16.mxu0 0
  %785 = vmatpush1.bf16.msra.mxu0 0
  %786 = vmatprep.subr.bf16.mxu0 0
  %787 = vmatpush1.bf16.msra.mxu0 0
  %788 = vmatprep.subr.bf16.mxu0 0
  %789 = vmatpush1.bf16.msra.mxu0 0
  %790 = vmatprep.subr.bf16.mxu0 0
  %791 = vmatpush1.bf16.msra.mxu0 0
  %792 = vmatprep.subr.bf16.mxu0 0
  %793 = vmatpush1.bf16.msra.mxu0 %v735
  %794 = vmatprep.subr.bf16.mxu0 0
  %795 = vmatpush2.bf16.msra.mxu0 0
  %796 = vmatprep.subr.bf16.mxu0 0
  %797 = vmatpush2.bf16.msra.mxu0 0
  %798 = vmatprep.subr.bf16.mxu0 0
  %799 = vmatpush2.bf16.msra.mxu0 0
  %800 = vmatprep.subr.bf16.mxu0 0
  %801 = vmatpush2.bf16.msra.mxu0 0
  %802 = vmatprep.subr.bf16.mxu0 0
  %803 = vmatpush2.bf16.msra.mxu0 0
  %804 = vmatprep.subr.bf16.mxu0 0
  %805 = vmatpush2.bf16.msra.mxu0 0
  %806 = vmatprep.subr.bf16.mxu0 0
  %807 = vmatpush2.bf16.msra.mxu0 0
  %808 = vmatprep.subr.bf16.mxu0 0
  %809 = vmatpush2.bf16.msra.mxu0 0
  %810 = vmatprep.mubr.bf16.mxu0 0
  %811 = vmatmul.mubr.bf16.gmra.mxu0 %v726
  %v812 = vpop.f32.mrf.mxu0
  %v813 = vadd.f32 0.0, %v812
  %v814 = vpop.f32.mrf.mxu0
  %v815 = vpop.f32.mrf.mxu0
  %v816 = vpop.f32.mrf.mxu0
  %817 = vdwg.mxu0
  %v818 = vadd.f32 %v711, %v772
  %v819 = vadd.f32 %v712, %v774
  %v820 = vadd.f32 %v713, %v813
  %s821 = scalar_lea.vmem %s1, 28
  %v822 = vld [vmem:[%s821] sm:$0xf]
  %823 = vrot.lane.b32.xlu0 %v86, 91
  %v824 = vpop.permute.xlu0 %823
  %825 = vrot.lane.b32.xlu0 %v87, 91
  %v826 = vpop.permute.xlu0 %825
  %827 = vrot.lane.b32.xlu0 %v88, 91
  %v828 = vpop.permute.xlu0 %827
  %vm829 = vcmask 744448
  %v830 = vsel %vm829, %v824, %v826
  %v831 = vsel %vm829, %v826, %v828
  %v833 = vsel %vm98, %v822, 0
  %v836 = vsel %vm102, %v830, 0
  %v839 = vsel %vm102, %v831, 0
  %v842 = vsel %vm102, %v828, 0
  %844 = vmatprep.subr.bf16.mxu0 0
  %845 = vmatpush1.bf16.msra.mxu0 0
  %846 = vmatprep.subr.bf16.mxu0 0
  %847 = vmatpush1.bf16.msra.mxu0 0
  %848 = vmatprep.subr.bf16.mxu0 0
  %849 = vmatpush1.bf16.msra.mxu0 0
  %850 = vmatprep.subr.bf16.mxu0 0
  %851 = vmatpush1.bf16.msra.mxu0 0
  %852 = vmatprep.subr.bf16.mxu0 0
  %853 = vmatpush1.bf16.msra.mxu0 0
  %854 = vmatprep.subr.bf16.mxu0 0
  %855 = vmatpush1.bf16.msra.mxu0 0
  %856 = vmatprep.subr.bf16.mxu0 0
  %857 = vmatpush1.bf16.msra.mxu0 0
  %858 = vmatprep.subr.bf16.mxu0 %v839
  %859 = vmatpush1.bf16.msra.mxu0 %v836
  %860 = vmatprep.subr.bf16.mxu0 0
  %861 = vmatpush2.bf16.msra.mxu0 0
  %862 = vmatprep.subr.bf16.mxu0 0
  %863 = vmatpush2.bf16.msra.mxu0 0
  %864 = vmatprep.subr.bf16.mxu0 0
  %865 = vmatpush2.bf16.msra.mxu0 0
  %866 = vmatprep.subr.bf16.mxu0 0
  %867 = vmatpush2.bf16.msra.mxu0 0
  %868 = vmatprep.subr.bf16.mxu0 0
  %869 = vmatpush2.bf16.msra.mxu0 0
  %870 = vmatprep.subr.bf16.mxu0 0
  %871 = vmatpush2.bf16.msra.mxu0 0
  %872 = vmatprep.subr.bf16.mxu0 0
  %873 = vmatpush2.bf16.msra.mxu0 0
  %874 = vmatprep.subr.bf16.mxu0 0
  %875 = vmatpush2.bf16.msra.mxu0 0
  %876 = vmatprep.mubr.bf16.mxu0 0
  %877 = vmatmul.mubr.bf16.gmra.mxu0 %v833
  %v878 = vpop.f32.mrf.mxu0
  %v879 = vadd.f32 0.0, %v878
  %v880 = vpop.f32.mrf.mxu0
  %v881 = vadd.f32 0.0, %v880
  %v882 = vpop.f32.mrf.mxu0
  %v883 = vpop.f32.mrf.mxu0
  %884 = vdwg.mxu0
  %885 = vmatprep.subr.bf16.mxu0 0
  %886 = vmatpush1.bf16.msra.mxu0 0
  %887 = vmatprep.subr.bf16.mxu0 0
  %888 = vmatpush1.bf16.msra.mxu0 0
  %889 = vmatprep.subr.bf16.mxu0 0
  %890 = vmatpush1.bf16.msra.mxu0 0
  %891 = vmatprep.subr.bf16.mxu0 0
  %892 = vmatpush1.bf16.msra.mxu0 0
  %893 = vmatprep.subr.bf16.mxu0 0
  %894 = vmatpush1.bf16.msra.mxu0 0
  %895 = vmatprep.subr.bf16.mxu0 0
  %896 = vmatpush1.bf16.msra.mxu0 0
  %897 = vmatprep.subr.bf16.mxu0 0
  %898 = vmatpush1.bf16.msra.mxu0 0
  %899 = vmatprep.subr.bf16.mxu0 0
  %900 = vmatpush1.bf16.msra.mxu0 %v842
  %901 = vmatprep.subr.bf16.mxu0 0
  %902 = vmatpush2.bf16.msra.mxu0 0
  %903 = vmatprep.subr.bf16.mxu0 0
  %904 = vmatpush2.bf16.msra.mxu0 0
  %905 = vmatprep.subr.bf16.mxu0 0
  %906 = vmatpush2.bf16.msra.mxu0 0
  %907 = vmatprep.subr.bf16.mxu0 0
  %908 = vmatpush2.bf16.msra.mxu0 0
  %909 = vmatprep.subr.bf16.mxu0 0
  %910 = vmatpush2.bf16.msra.mxu0 0
  %911 = vmatprep.subr.bf16.mxu0 0
  %912 = vmatpush2.bf16.msra.mxu0 0
  %913 = vmatprep.subr.bf16.mxu0 0
  %914 = vmatpush2.bf16.msra.mxu0 0
  %915 = vmatprep.subr.bf16.mxu0 0
  %916 = vmatpush2.bf16.msra.mxu0 0
  %917 = vmatprep.mubr.bf16.mxu0 0
  %918 = vmatmul.mubr.bf16.gmra.mxu0 %v833
  %v919 = vpop.f32.mrf.mxu0
  %v920 = vadd.f32 0.0, %v919
  %v921 = vpop.f32.mrf.mxu0
  %v922 = vpop.f32.mrf.mxu0
  %v923 = vpop.f32.mrf.mxu0
  %924 = vdwg.mxu0
  %v925 = vadd.f32 %v818, %v879
  %v926 = vadd.f32 %v819, %v881
  %v927 = vadd.f32 %v820, %v920
  %s928 = scalar_lea.vmem %s1, 32
  %v929 = vld [vmem:[%s928] sm:$0xf]
  %930 = vrot.lane.b32.xlu0 %v86, 90
  %v931 = vpop.permute.xlu0 %930
  %932 = vrot.lane.b32.xlu0 %v87, 90
  %v933 = vpop.permute.xlu0 %932
  %934 = vrot.lane.b32.xlu0 %v88, 90
  %v935 = vpop.permute.xlu0 %934
  %vm936 = vcmask 736256
  %v937 = vsel %vm936, %v931, %v933
  %v938 = vsel %vm936, %v933, %v935
  %v940 = vsel %vm98, %v929, 0
  %v943 = vsel %vm102, %v937, 0
  %v946 = vsel %vm102, %v938, 0
  %v949 = vsel %vm102, %v935, 0
  %951 = vmatprep.subr.bf16.mxu0 0
  %952 = vmatpush1.bf16.msra.mxu0 0
  %953 = vmatprep.subr.bf16.mxu0 0
  %954 = vmatpush1.bf16.msra.mxu0 0
  %955 = vmatprep.subr.bf16.mxu0 0
  %956 = vmatpush1.bf16.msra.mxu0 0
  %957 = vmatprep.subr.bf16.mxu0 0
  %958 = vmatpush1.bf16.msra.mxu0 0
  %959 = vmatprep.subr.bf16.mxu0 0
  %960 = vmatpush1.bf16.msra.mxu0 0
  %961 = vmatprep.subr.bf16.mxu0 0
  %962 = vmatpush1.bf16.msra.mxu0 0
  %963 = vmatprep.subr.bf16.mxu0 0
  %964 = vmatpush1.bf16.msra.mxu0 0
  %965 = vmatprep.subr.bf16.mxu0 %v946
  %966 = vmatpush1.bf16.msra.mxu0 %v943
  %967 = vmatprep.subr.bf16.mxu0 0
  %968 = vmatpush2.bf16.msra.mxu0 0
  %969 = vmatprep.subr.bf16.mxu0 0
  %970 = vmatpush2.bf16.msra.mxu0 0
  %971 = vmatprep.subr.bf16.mxu0 0
  %972 = vmatpush2.bf16.msra.mxu0 0
  %973 = vmatprep.subr.bf16.mxu0 0
  %974 = vmatpush2.bf16.msra.mxu0 0
  %975 = vmatprep.subr.bf16.mxu0 0
  %976 = vmatpush2.bf16.msra.mxu0 0
  %977 = vmatprep.subr.bf16.mxu0 0
  %978 = vmatpush2.bf16.msra.mxu0 0
  %979 = vmatprep.subr.bf16.mxu0 0
  %980 = vmatpush2.bf16.msra.mxu0 0
  %981 = vmatprep.subr.bf16.mxu0 0
  %982 = vmatpush2.bf16.msra.mxu0 0
  %983 = vmatprep.mubr.bf16.mxu0 0
  %984 = vmatmul.mubr.bf16.gmra.mxu0 %v940
  %v985 = vpop.f32.mrf.mxu0
  %v986 = vadd.f32 0.0, %v985
  %v987 = vpop.f32.mrf.mxu0
  %v988 = vadd.f32 0.0, %v987
  %v989 = vpop.f32.mrf.mxu0
  %v990 = vpop.f32.mrf.mxu0
  %991 = vdwg.mxu0
  %992 = vmatprep.subr.bf16.mxu0 0
  %993 = vmatpush1.bf16.msra.mxu0 0
  %994 = vmatprep.subr.bf16.mxu0 0
  %995 = vmatpush1.bf16.msra.mxu0 0
  %996 = vmatprep.subr.bf16.mxu0 0
  %997 = vmatpush1.bf16.msra.mxu0 0
  %998 = vmatprep.subr.bf16.mxu0 0
  %999 = vmatpush1.bf16.msra.mxu0 0
  %1000 = vmatprep.subr.bf16.mxu0 0
  %1001 = vmatpush1.bf16.msra.mxu0 0
  %1002 = vmatprep.subr.bf16.mxu0 0
  %1003 = vmatpush1.bf16.msra.mxu0 0
  %1004 = vmatprep.subr.bf16.mxu0 0
  %1005 = vmatpush1.bf16.msra.mxu0 0
  %1006 = vmatprep.subr.bf16.mxu0 0
  %1007 = vmatpush1.bf16.msra.mxu0 %v949
  %1008 = vmatprep.subr.bf16.mxu0 0
  %1009 = vmatpush2.bf16.msra.mxu0 0
  %1010 = vmatprep.subr.bf16.mxu0 0
  %1011 = vmatpush2.bf16.msra.mxu0 0
  %1012 = vmatprep.subr.bf16.mxu0 0
  %1013 = vmatpush2.bf16.msra.mxu0 0
  %1014 = vmatprep.subr.bf16.mxu0 0
  %1015 = vmatpush2.bf16.msra.mxu0 0
  %1016 = vmatprep.subr.bf16.mxu0 0
  %1017 = vmatpush2.bf16.msra.mxu0 0
  %1018 = vmatprep.subr.bf16.mxu0 0
  %1019 = vmatpush2.bf16.msra.mxu0 0
  %1020 = vmatprep.subr.bf16.mxu0 0
  %1021 = vmatpush2.bf16.msra.mxu0 0
  %1022 = vmatprep.subr.bf16.mxu0 0
  %1023 = vmatpush2.bf16.msra.mxu0 0
  %1024 = vmatprep.mubr.bf16.mxu0 0
  %1025 = vmatmul.mubr.bf16.gmra.mxu0 %v940
  %v1026 = vpop.f32.mrf.mxu0
  %v1027 = vadd.f32 0.0, %v1026
  %v1028 = vpop.f32.mrf.mxu0
  %v1029 = vpop.f32.mrf.mxu0
  %v1030 = vpop.f32.mrf.mxu0
  %1031 = vdwg.mxu0
  %v1032 = vadd.f32 %v925, %v986
  %v1033 = vadd.f32 %v926, %v988
  %v1034 = vadd.f32 %v927, %v1027
  %v1035 = vpack.c.bf16 %v1032, %v1032
  %v1036 = vpack.c.bf16 %v1033, %v1033
  %v1037 = vpack.c.bf16 %v1034, %v1034
  %v1041 = vunpack.c.l.b16 %v1035
  %v1042 = vunpack.c.l.b16 %v1036
  %v1043 = vunpack.c.l.b16 %v1037
  %v1044 = vpack.c.b16 %v1042, %v1041
  %v1045 = vpack.c.b16 %v1043, %v1043
  %1048 = vst [vmem:[%s2] sm:$0xff] %v1044
  %vm1049 = vcmask 257024
  %1050 = vst.msk [vmem:[%s2 + $0x8] sm:$0xf] %vm1049, %v1045
  %v1051 = vmul.f32 %v1032, %v73
  %v1052 = vmul.f32 %v1033, %v74
  %v1053 = vmul.f32 %v1034, %v75
  %v1054 = vadd.f32 %v1051, %v1052
  %vm1055 = vcmask 261120
  %v1056 = vsel %vm1055, %v1053, 0.0
  %v1057 = vadd.f32 %v1054, %v1056
  %1058 = vadd.xlane.f32.xlu0 %v1057
  %v1059 = vpop.xlane.xlu0 %1058
  %v1060 = vadd.f32 %v1059, 0.0
  %v1061 = vmul.f32 %v1051, %v1032
  %v1062 = vmul.f32 %v1052, %v1033
  %v1063 = vmul.f32 %v1053, %v1034
  %v1064 = vadd.f32 %v1061, %v1062
  %v1065 = vsel %vm1055, %v1063, 0.0
  %v1066 = vadd.f32 %v1064, %v1065
  %1067 = vadd.xlane.f32.xlu0 %v1066
  %v1068 = vpop.xlane.xlu0 %1067
  %v1069 = vadd.f32 %v1068, 0.0
  %s1070 = scalar_lea.vmem %s0, 12
  %v1071 = vld [vmem:[%s1070] sm:$0xff]
  %v1072 = vld [vmem:[%s1070 + $0x8] sm:$0xf]
  %v1073 = vld [vmem:[%s1] sm:$0xf]
  %v1074 = vld [vmem:[%s79] sm:$0xf]
  %v1077 = vunpack.c.l.b16 %v1071
  %v1078 = vunpack.c.h.b16 %v1071
  %v1079 = vunpack.c.l.b16 %v1072
  %v1080 = vpack.c.b16 %v1077, %v1077
  %v1081 = vpack.c.b16 %v1078, %v1078
  %v1082 = vpack.c.b16 %v1079, %v1079
  %1083 = vrot.lane.b32.xlu0 %v1080, 127
  %v1084 = vpop.permute.xlu0 %1083
  %1085 = vrot.lane.b32.xlu0 %v1081, 127
  %v1086 = vpop.permute.xlu0 %1085
  %1087 = vrot.lane.b32.xlu0 %v1082, 127
  %v1088 = vpop.permute.xlu0 %1087
  %v1089 = vsel %vm95, %v1084, %v1086
  %v1090 = vsel %vm95, %v1086, %v1088
  %v1092 = vsel %vm98, %v1074, 0
  %v1095 = vsel %vm102, %v1089, 0
  %v1098 = vsel %vm102, %v1090, 0
  %v1101 = vsel %vm102, %v1088, 0
  %1103 = vmatprep.subr.bf16.mxu0 0
  %1104 = vmatpush1.bf16.msra.mxu0 0
  %1105 = vmatprep.subr.bf16.mxu0 0
  %1106 = vmatpush1.bf16.msra.mxu0 0
  %1107 = vmatprep.subr.bf16.mxu0 0
  %1108 = vmatpush1.bf16.msra.mxu0 0
  %1109 = vmatprep.subr.bf16.mxu0 0
  %1110 = vmatpush1.bf16.msra.mxu0 0
  %1111 = vmatprep.subr.bf16.mxu0 0
  %1112 = vmatpush1.bf16.msra.mxu0 0
  %1113 = vmatprep.subr.bf16.mxu0 0
  %1114 = vmatpush1.bf16.msra.mxu0 0
  %1115 = vmatprep.subr.bf16.mxu0 0
  %1116 = vmatpush1.bf16.msra.mxu0 0
  %1117 = vmatprep.subr.bf16.mxu0 %v1098
  %1118 = vmatpush1.bf16.msra.mxu0 %v1095
  %1119 = vmatprep.subr.bf16.mxu0 0
  %1120 = vmatpush2.bf16.msra.mxu0 0
  %1121 = vmatprep.subr.bf16.mxu0 0
  %1122 = vmatpush2.bf16.msra.mxu0 0
  %1123 = vmatprep.subr.bf16.mxu0 0
  %1124 = vmatpush2.bf16.msra.mxu0 0
  %1125 = vmatprep.subr.bf16.mxu0 0
  %1126 = vmatpush2.bf16.msra.mxu0 0
  %1127 = vmatprep.subr.bf16.mxu0 0
  %1128 = vmatpush2.bf16.msra.mxu0 0
  %1129 = vmatprep.subr.bf16.mxu0 0
  %1130 = vmatpush2.bf16.msra.mxu0 0
  %1131 = vmatprep.subr.bf16.mxu0 0
  %1132 = vmatpush2.bf16.msra.mxu0 0
  %1133 = vmatprep.subr.bf16.mxu0 0
  %1134 = vmatpush2.bf16.msra.mxu0 0
  %1135 = vmatprep.mubr.bf16.mxu0 0
  %1136 = vmatmul.mubr.bf16.gmra.mxu0 %v1092
  %v1137 = vpop.f32.mrf.mxu0
  %v1138 = vadd.f32 0.0, %v1137
  %v1139 = vpop.f32.mrf.mxu0
  %v1140 = vadd.f32 0.0, %v1139
  %v1141 = vpop.f32.mrf.mxu0
  %v1142 = vpop.f32.mrf.mxu0
  %1143 = vdwg.mxu0
  %1144 = vmatprep.subr.bf16.mxu0 0
  %1145 = vmatpush1.bf16.msra.mxu0 0
  %1146 = vmatprep.subr.bf16.mxu0 0
  %1147 = vmatpush1.bf16.msra.mxu0 0
  %1148 = vmatprep.subr.bf16.mxu0 0
  %1149 = vmatpush1.bf16.msra.mxu0 0
  %1150 = vmatprep.subr.bf16.mxu0 0
  %1151 = vmatpush1.bf16.msra.mxu0 0
  %1152 = vmatprep.subr.bf16.mxu0 0
  %1153 = vmatpush1.bf16.msra.mxu0 0
  %1154 = vmatprep.subr.bf16.mxu0 0
  %1155 = vmatpush1.bf16.msra.mxu0 0
  %1156 = vmatprep.subr.bf16.mxu0 0
  %1157 = vmatpush1.bf16.msra.mxu0 0
  %1158 = vmatprep.subr.bf16.mxu0 0
  %1159 = vmatpush1.bf16.msra.mxu0 %v1101
  %1160 = vmatprep.subr.bf16.mxu0 0
  %1161 = vmatpush2.bf16.msra.mxu0 0
  %1162 = vmatprep.subr.bf16.mxu0 0
  %1163 = vmatpush2.bf16.msra.mxu0 0
  %1164 = vmatprep.subr.bf16.mxu0 0
  %1165 = vmatpush2.bf16.msra.mxu0 0
  %1166 = vmatprep.subr.bf16.mxu0 0
  %1167 = vmatpush2.bf16.msra.mxu0 0
  %1168 = vmatprep.subr.bf16.mxu0 0
  %1169 = vmatpush2.bf16.msra.mxu0 0
  %1170 = vmatprep.subr.bf16.mxu0 0
  %1171 = vmatpush2.bf16.msra.mxu0 0
  %1172 = vmatprep.subr.bf16.mxu0 0
  %1173 = vmatpush2.bf16.msra.mxu0 0
  %1174 = vmatprep.subr.bf16.mxu0 0
  %1175 = vmatpush2.bf16.msra.mxu0 0
  %1176 = vmatprep.mubr.bf16.mxu0 0
  %1177 = vmatmul.mubr.bf16.gmra.mxu0 %v1092
  %v1178 = vpop.f32.mrf.mxu0
  %v1179 = vadd.f32 0.0, %v1178
  %v1180 = vpop.f32.mrf.mxu0
  %v1181 = vpop.f32.mrf.mxu0
  %v1182 = vpop.f32.mrf.mxu0
  %1183 = vdwg.mxu0
  %v1185 = vsel %vm98, %v1073, 0
  %v1188 = vsel %vm102, %v1080, 0
  %v1191 = vsel %vm102, %v1081, 0
  %v1194 = vsel %vm102, %v1082, 0
  %1196 = vmatprep.subr.bf16.mxu0 0
  %1197 = vmatpush1.bf16.msra.mxu0 0
  %1198 = vmatprep.subr.bf16.mxu0 0
  %1199 = vmatpush1.bf16.msra.mxu0 0
  %1200 = vmatprep.subr.bf16.mxu0 0
  %1201 = vmatpush1.bf16.msra.mxu0 0
  %1202 = vmatprep.subr.bf16.mxu0 0
  %1203 = vmatpush1.bf16.msra.mxu0 0
  %1204 = vmatprep.subr.bf16.mxu0 0
  %1205 = vmatpush1.bf16.msra.mxu0 0
  %1206 = vmatprep.subr.bf16.mxu0 0
  %1207 = vmatpush1.bf16.msra.mxu0 0
  %1208 = vmatprep.subr.bf16.mxu0 0
  %1209 = vmatpush1.bf16.msra.mxu0 0
  %1210 = vmatprep.subr.bf16.mxu0 %v1191
  %1211 = vmatpush1.bf16.msra.mxu0 %v1188
  %1212 = vmatprep.subr.bf16.mxu0 0
  %1213 = vmatpush2.bf16.msra.mxu0 0
  %1214 = vmatprep.subr.bf16.mxu0 0
  %1215 = vmatpush2.bf16.msra.mxu0 0
  %1216 = vmatprep.subr.bf16.mxu0 0
  %1217 = vmatpush2.bf16.msra.mxu0 0
  %1218 = vmatprep.subr.bf16.mxu0 0
  %1219 = vmatpush2.bf16.msra.mxu0 0
  %1220 = vmatprep.subr.bf16.mxu0 0
  %1221 = vmatpush2.bf16.msra.mxu0 0
  %1222 = vmatprep.subr.bf16.mxu0 0
  %1223 = vmatpush2.bf16.msra.mxu0 0
  %1224 = vmatprep.subr.bf16.mxu0 0
  %1225 = vmatpush2.bf16.msra.mxu0 0
  %1226 = vmatprep.subr.bf16.mxu0 0
  %1227 = vmatpush2.bf16.msra.mxu0 0
  %1228 = vmatprep.mubr.bf16.mxu0 0
  %1229 = vmatmul.mubr.bf16.gmra.mxu0 %v1185
  %v1230 = vpop.f32.mrf.mxu0
  %v1231 = vadd.f32 %v1138, %v1230
  %v1232 = vpop.f32.mrf.mxu0
  %v1233 = vadd.f32 %v1140, %v1232
  %v1234 = vpop.f32.mrf.mxu0
  %v1235 = vpop.f32.mrf.mxu0
  %1236 = vdwg.mxu0
  %1237 = vmatprep.subr.bf16.mxu0 0
  %1238 = vmatpush1.bf16.msra.mxu0 0
  %1239 = vmatprep.subr.bf16.mxu0 0
  %1240 = vmatpush1.bf16.msra.mxu0 0
  %1241 = vmatprep.subr.bf16.mxu0 0
  %1242 = vmatpush1.bf16.msra.mxu0 0
  %1243 = vmatprep.subr.bf16.mxu0 0
  %1244 = vmatpush1.bf16.msra.mxu0 0
  %1245 = vmatprep.subr.bf16.mxu0 0
  %1246 = vmatpush1.bf16.msra.mxu0 0
  %1247 = vmatprep.subr.bf16.mxu0 0
  %1248 = vmatpush1.bf16.msra.mxu0 0
  %1249 = vmatprep.subr.bf16.mxu0 0
  %1250 = vmatpush1.bf16.msra.mxu0 0
  %1251 = vmatprep.subr.bf16.mxu0 0
  %1252 = vmatpush1.bf16.msra.mxu0 %v1194
  %1253 = vmatprep.subr.bf16.mxu0 0
  %1254 = vmatpush2.bf16.msra.mxu0 0
  %1255 = vmatprep.subr.bf16.mxu0 0
  %1256 = vmatpush2.bf16.msra.mxu0 0
  %1257 = vmatprep.subr.bf16.mxu0 0
  %1258 = vmatpush2.bf16.msra.mxu0 0
  %1259 = vmatprep.subr.bf16.mxu0 0
  %1260 = vmatpush2.bf16.msra.mxu0 0
  %1261 = vmatprep.subr.bf16.mxu0 0
  %1262 = vmatpush2.bf16.msra.mxu0 0
  %1263 = vmatprep.subr.bf16.mxu0 0
  %1264 = vmatpush2.bf16.msra.mxu0 0
  %1265 = vmatprep.subr.bf16.mxu0 0
  %1266 = vmatpush2.bf16.msra.mxu0 0
  %1267 = vmatprep.subr.bf16.mxu0 0
  %1268 = vmatpush2.bf16.msra.mxu0 0
  %1269 = vmatprep.mubr.bf16.mxu0 0
  %1270 = vmatmul.mubr.bf16.gmra.mxu0 %v1185
  %v1271 = vpop.f32.mrf.mxu0
  %v1272 = vadd.f32 %v1179, %v1271
  %v1273 = vpop.f32.mrf.mxu0
  %v1274 = vpop.f32.mrf.mxu0
  %v1275 = vpop.f32.mrf.mxu0
  %1276 = vdwg.mxu0
  %v1277 = vld [vmem:[%s286] sm:$0xf]
  %1278 = vrot.lane.b32.xlu0 %v1080, 126
  %v1279 = vpop.permute.xlu0 %1278
  %1280 = vrot.lane.b32.xlu0 %v1081, 126
  %v1281 = vpop.permute.xlu0 %1280
  %1282 = vrot.lane.b32.xlu0 %v1082, 126
  %v1283 = vpop.permute.xlu0 %1282
  %v1284 = vsel %vm294, %v1279, %v1281
  %v1285 = vsel %vm294, %v1281, %v1283
  %v1287 = vsel %vm98, %v1277, 0
  %v1290 = vsel %vm102, %v1284, 0
  %v1293 = vsel %vm102, %v1285, 0
  %v1296 = vsel %vm102, %v1283, 0
  %1298 = vmatprep.subr.bf16.mxu0 0
  %1299 = vmatpush1.bf16.msra.mxu0 0
  %1300 = vmatprep.subr.bf16.mxu0 0
  %1301 = vmatpush1.bf16.msra.mxu0 0
  %1302 = vmatprep.subr.bf16.mxu0 0
  %1303 = vmatpush1.bf16.msra.mxu0 0
  %1304 = vmatprep.subr.bf16.mxu0 0
  %1305 = vmatpush1.bf16.msra.mxu0 0
  %1306 = vmatprep.subr.bf16.mxu0 0
  %1307 = vmatpush1.bf16.msra.mxu0 0
  %1308 = vmatprep.subr.bf16.mxu0 0
  %1309 = vmatpush1.bf16.msra.mxu0 0
  %1310 = vmatprep.subr.bf16.mxu0 0
  %1311 = vmatpush1.bf16.msra.mxu0 0
  %1312 = vmatprep.subr.bf16.mxu0 %v1293
  %1313 = vmatpush1.bf16.msra.mxu0 %v1290
  %1314 = vmatprep.subr.bf16.mxu0 0
  %1315 = vmatpush2.bf16.msra.mxu0 0
  %1316 = vmatprep.subr.bf16.mxu0 0
  %1317 = vmatpush2.bf16.msra.mxu0 0
  %1318 = vmatprep.subr.bf16.mxu0 0
  %1319 = vmatpush2.bf16.msra.mxu0 0
  %1320 = vmatprep.subr.bf16.mxu0 0
  %1321 = vmatpush2.bf16.msra.mxu0 0
  %1322 = vmatprep.subr.bf16.mxu0 0
  %1323 = vmatpush2.bf16.msra.mxu0 0
  %1324 = vmatprep.subr.bf16.mxu0 0
  %1325 = vmatpush2.bf16.msra.mxu0 0
  %1326 = vmatprep.subr.bf16.mxu0 0
  %1327 = vmatpush2.bf16.msra.mxu0 0
  %1328 = vmatprep.subr.bf16.mxu0 0
  %1329 = vmatpush2.bf16.msra.mxu0 0
  %1330 = vmatprep.mubr.bf16.mxu0 0
  %1331 = vmatmul.mubr.bf16.gmra.mxu0 %v1287
  %v1332 = vpop.f32.mrf.mxu0
  %v1333 = vadd.f32 0.0, %v1332
  %v1334 = vpop.f32.mrf.mxu0
  %v1335 = vadd.f32 0.0, %v1334
  %v1336 = vpop.f32.mrf.mxu0
  %v1337 = vpop.f32.mrf.mxu0
  %1338 = vdwg.mxu0
  %1339 = vmatprep.subr.bf16.mxu0 0
  %1340 = vmatpush1.bf16.msra.mxu0 0
  %1341 = vmatprep.subr.bf16.mxu0 0
  %1342 = vmatpush1.bf16.msra.mxu0 0
  %1343 = vmatprep.subr.bf16.mxu0 0
  %1344 = vmatpush1.bf16.msra.mxu0 0
  %1345 = vmatprep.subr.bf16.mxu0 0
  %1346 = vmatpush1.bf16.msra.mxu0 0
  %1347 = vmatprep.subr.bf16.mxu0 0
  %1348 = vmatpush1.bf16.msra.mxu0 0
  %1349 = vmatprep.subr.bf16.mxu0 0
  %1350 = vmatpush1.bf16.msra.mxu0 0
  %1351 = vmatprep.subr.bf16.mxu0 0
  %1352 = vmatpush1.bf16.msra.mxu0 0
  %1353 = vmatprep.subr.bf16.mxu0 0
  %1354 = vmatpush1.bf16.msra.mxu0 %v1296
  %1355 = vmatprep.subr.bf16.mxu0 0
  %1356 = vmatpush2.bf16.msra.mxu0 0
  %1357 = vmatprep.subr.bf16.mxu0 0
  %1358 = vmatpush2.bf16.msra.mxu0 0
  %1359 = vmatprep.subr.bf16.mxu0 0
  %1360 = vmatpush2.bf16.msra.mxu0 0
  %1361 = vmatprep.subr.bf16.mxu0 0
  %1362 = vmatpush2.bf16.msra.mxu0 0
  %1363 = vmatprep.subr.bf16.mxu0 0
  %1364 = vmatpush2.bf16.msra.mxu0 0
  %1365 = vmatprep.subr.bf16.mxu0 0
  %1366 = vmatpush2.bf16.msra.mxu0 0
  %1367 = vmatprep.subr.bf16.mxu0 0
  %1368 = vmatpush2.bf16.msra.mxu0 0
  %1369 = vmatprep.subr.bf16.mxu0 0
  %1370 = vmatpush2.bf16.msra.mxu0 0
  %1371 = vmatprep.mubr.bf16.mxu0 0
  %1372 = vmatmul.mubr.bf16.gmra.mxu0 %v1287
  %v1373 = vpop.f32.mrf.mxu0
  %v1374 = vadd.f32 0.0, %v1373
  %v1375 = vpop.f32.mrf.mxu0
  %v1376 = vpop.f32.mrf.mxu0
  %v1377 = vpop.f32.mrf.mxu0
  %1378 = vdwg.mxu0
  %v1379 = vadd.f32 %v1231, %v1333
  %v1380 = vadd.f32 %v1233, %v1335
  %v1381 = vadd.f32 %v1272, %v1374
  %v1382 = vld [vmem:[%s393] sm:$0xf]
  %1383 = vrot.lane.b32.xlu0 %v1080, 110
  %v1384 = vpop.permute.xlu0 %1383
  %1385 = vrot.lane.b32.xlu0 %v1081, 110
  %v1386 = vpop.permute.xlu0 %1385
  %1387 = vrot.lane.b32.xlu0 %v1082, 110
  %v1388 = vpop.permute.xlu0 %1387
  %v1389 = vsel %vm401, %v1384, %v1386
  %v1390 = vsel %vm401, %v1386, %v1388
  %v1392 = vsel %vm98, %v1382, 0
  %v1395 = vsel %vm102, %v1389, 0
  %v1398 = vsel %vm102, %v1390, 0
  %v1401 = vsel %vm102, %v1388, 0
  %1403 = vmatprep.subr.bf16.mxu0 0
  %1404 = vmatpush1.bf16.msra.mxu0 0
  %1405 = vmatprep.subr.bf16.mxu0 0
  %1406 = vmatpush1.bf16.msra.mxu0 0
  %1407 = vmatprep.subr.bf16.mxu0 0
  %1408 = vmatpush1.bf16.msra.mxu0 0
  %1409 = vmatprep.subr.bf16.mxu0 0
  %1410 = vmatpush1.bf16.msra.mxu0 0
  %1411 = vmatprep.subr.bf16.mxu0 0
  %1412 = vmatpush1.bf16.msra.mxu0 0
  %1413 = vmatprep.subr.bf16.mxu0 0
  %1414 = vmatpush1.bf16.msra.mxu0 0
  %1415 = vmatprep.subr.bf16.mxu0 0
  %1416 = vmatpush1.bf16.msra.mxu0 0
  %1417 = vmatprep.subr.bf16.mxu0 %v1398
  %1418 = vmatpush1.bf16.msra.mxu0 %v1395
  %1419 = vmatprep.subr.bf16.mxu0 0
  %1420 = vmatpush2.bf16.msra.mxu0 0
  %1421 = vmatprep.subr.bf16.mxu0 0
  %1422 = vmatpush2.bf16.msra.mxu0 0
  %1423 = vmatprep.subr.bf16.mxu0 0
  %1424 = vmatpush2.bf16.msra.mxu0 0
  %1425 = vmatprep.subr.bf16.mxu0 0
  %1426 = vmatpush2.bf16.msra.mxu0 0
  %1427 = vmatprep.subr.bf16.mxu0 0
  %1428 = vmatpush2.bf16.msra.mxu0 0
  %1429 = vmatprep.subr.bf16.mxu0 0
  %1430 = vmatpush2.bf16.msra.mxu0 0
  %1431 = vmatprep.subr.bf16.mxu0 0
  %1432 = vmatpush2.bf16.msra.mxu0 0
  %1433 = vmatprep.subr.bf16.mxu0 0
  %1434 = vmatpush2.bf16.msra.mxu0 0
  %1435 = vmatprep.mubr.bf16.mxu0 0
  %1436 = vmatmul.mubr.bf16.gmra.mxu0 %v1392
  %v1437 = vpop.f32.mrf.mxu0
  %v1438 = vadd.f32 0.0, %v1437
  %v1439 = vpop.f32.mrf.mxu0
  %v1440 = vadd.f32 0.0, %v1439
  %v1441 = vpop.f32.mrf.mxu0
  %v1442 = vpop.f32.mrf.mxu0
  %1443 = vdwg.mxu0
  %1444 = vmatprep.subr.bf16.mxu0 0
  %1445 = vmatpush1.bf16.msra.mxu0 0
  %1446 = vmatprep.subr.bf16.mxu0 0
  %1447 = vmatpush1.bf16.msra.mxu0 0
  %1448 = vmatprep.subr.bf16.mxu0 0
  %1449 = vmatpush1.bf16.msra.mxu0 0
  %1450 = vmatprep.subr.bf16.mxu0 0
  %1451 = vmatpush1.bf16.msra.mxu0 0
  %1452 = vmatprep.subr.bf16.mxu0 0
  %1453 = vmatpush1.bf16.msra.mxu0 0
  %1454 = vmatprep.subr.bf16.mxu0 0
  %1455 = vmatpush1.bf16.msra.mxu0 0
  %1456 = vmatprep.subr.bf16.mxu0 0
  %1457 = vmatpush1.bf16.msra.mxu0 0
  %1458 = vmatprep.subr.bf16.mxu0 0
  %1459 = vmatpush1.bf16.msra.mxu0 %v1401
  %1460 = vmatprep.subr.bf16.mxu0 0
  %1461 = vmatpush2.bf16.msra.mxu0 0
  %1462 = vmatprep.subr.bf16.mxu0 0
  %1463 = vmatpush2.bf16.msra.mxu0 0
  %1464 = vmatprep.subr.bf16.mxu0 0
  %1465 = vmatpush2.bf16.msra.mxu0 0
  %1466 = vmatprep.subr.bf16.mxu0 0
  %1467 = vmatpush2.bf16.msra.mxu0 0
  %1468 = vmatprep.subr.bf16.mxu0 0
  %1469 = vmatpush2.bf16.msra.mxu0 0
  %1470 = vmatprep.subr.bf16.mxu0 0
  %1471 = vmatpush2.bf16.msra.mxu0 0
  %1472 = vmatprep.subr.bf16.mxu0 0
  %1473 = vmatpush2.bf16.msra.mxu0 0
  %1474 = vmatprep.subr.bf16.mxu0 0
  %1475 = vmatpush2.bf16.msra.mxu0 0
  %1476 = vmatprep.mubr.bf16.mxu0 0
  %1477 = vmatmul.mubr.bf16.gmra.mxu0 %v1392
  %v1478 = vpop.f32.mrf.mxu0
  %v1479 = vadd.f32 0.0, %v1478
  %v1480 = vpop.f32.mrf.mxu0
  %v1481 = vpop.f32.mrf.mxu0
  %v1482 = vpop.f32.mrf.mxu0
  %1483 = vdwg.mxu0
  %v1484 = vadd.f32 %v1379, %v1438
  %v1485 = vadd.f32 %v1380, %v1440
  %v1486 = vadd.f32 %v1381, %v1479
  %v1487 = vld [vmem:[%s500] sm:$0xf]
  %1488 = vrot.lane.b32.xlu0 %v1080, 109
  %v1489 = vpop.permute.xlu0 %1488
  %1490 = vrot.lane.b32.xlu0 %v1081, 109
  %v1491 = vpop.permute.xlu0 %1490
  %1492 = vrot.lane.b32.xlu0 %v1082, 109
  %v1493 = vpop.permute.xlu0 %1492
  %v1494 = vsel %vm508, %v1489, %v1491
  %v1495 = vsel %vm508, %v1491, %v1493
  %v1497 = vsel %vm98, %v1487, 0
  %v1500 = vsel %vm102, %v1494, 0
  %v1503 = vsel %vm102, %v1495, 0
  %v1506 = vsel %vm102, %v1493, 0
  %1508 = vmatprep.subr.bf16.mxu0 0
  %1509 = vmatpush1.bf16.msra.mxu0 0
  %1510 = vmatprep.subr.bf16.mxu0 0
  %1511 = vmatpush1.bf16.msra.mxu0 0
  %1512 = vmatprep.subr.bf16.mxu0 0
  %1513 = vmatpush1.bf16.msra.mxu0 0
  %1514 = vmatprep.subr.bf16.mxu0 0
  %1515 = vmatpush1.bf16.msra.mxu0 0
  %1516 = vmatprep.subr.bf16.mxu0 0
  %1517 = vmatpush1.bf16.msra.mxu0 0
  %1518 = vmatprep.subr.bf16.mxu0 0
  %1519 = vmatpush1.bf16.msra.mxu0 0
  %1520 = vmatprep.subr.bf16.mxu0 0
  %1521 = vmatpush1.bf16.msra.mxu0 0
  %1522 = vmatprep.subr.bf16.mxu0 %v1503
  %1523 = vmatpush1.bf16.msra.mxu0 %v1500
  %1524 = vmatprep.subr.bf16.mxu0 0
  %1525 = vmatpush2.bf16.msra.mxu0 0
  %1526 = vmatprep.subr.bf16.mxu0 0
  %1527 = vmatpush2.bf16.msra.mxu0 0
  %1528 = vmatprep.subr.bf16.mxu0 0
  %1529 = vmatpush2.bf16.msra.mxu0 0
  %1530 = vmatprep.subr.bf16.mxu0 0
  %1531 = vmatpush2.bf16.msra.mxu0 0
  %1532 = vmatprep.subr.bf16.mxu0 0
  %1533 = vmatpush2.bf16.msra.mxu0 0
  %1534 = vmatprep.subr.bf16.mxu0 0
  %1535 = vmatpush2.bf16.msra.mxu0 0
  %1536 = vmatprep.subr.bf16.mxu0 0
  %1537 = vmatpush2.bf16.msra.mxu0 0
  %1538 = vmatprep.subr.bf16.mxu0 0
  %1539 = vmatpush2.bf16.msra.mxu0 0
  %1540 = vmatprep.mubr.bf16.mxu0 0
  %1541 = vmatmul.mubr.bf16.gmra.mxu0 %v1497
  %v1542 = vpop.f32.mrf.mxu0
  %v1543 = vadd.f32 0.0, %v1542
  %v1544 = vpop.f32.mrf.mxu0
  %v1545 = vadd.f32 0.0, %v1544
  %v1546 = vpop.f32.mrf.mxu0
  %v1547 = vpop.f32.mrf.mxu0
  %1548 = vdwg.mxu0
  %1549 = vmatprep.subr.bf16.mxu0 0
  %1550 = vmatpush1.bf16.msra.mxu0 0
  %1551 = vmatprep.subr.bf16.mxu0 0
  %1552 = vmatpush1.bf16.msra.mxu0 0
  %1553 = vmatprep.subr.bf16.mxu0 0
  %1554 = vmatpush1.bf16.msra.mxu0 0
  %1555 = vmatprep.subr.bf16.mxu0 0
  %1556 = vmatpush1.bf16.msra.mxu0 0
  %1557 = vmatprep.subr.bf16.mxu0 0
  %1558 = vmatpush1.bf16.msra.mxu0 0
  %1559 = vmatprep.subr.bf16.mxu0 0
  %1560 = vmatpush1.bf16.msra.mxu0 0
  %1561 = vmatprep.subr.bf16.mxu0 0
  %1562 = vmatpush1.bf16.msra.mxu0 0
  %1563 = vmatprep.subr.bf16.mxu0 0
  %1564 = vmatpush1.bf16.msra.mxu0 %v1506
  %1565 = vmatprep.subr.bf16.mxu0 0
  %1566 = vmatpush2.bf16.msra.mxu0 0
  %1567 = vmatprep.subr.bf16.mxu0 0
  %1568 = vmatpush2.bf16.msra.mxu0 0
  %1569 = vmatprep.subr.bf16.mxu0 0
  %1570 = vmatpush2.bf16.msra.mxu0 0
  %1571 = vmatprep.subr.bf16.mxu0 0
  %1572 = vmatpush2.bf16.msra.mxu0 0
  %1573 = vmatprep.subr.bf16.mxu0 0
  %1574 = vmatpush2.bf16.msra.mxu0 0
  %1575 = vmatprep.subr.bf16.mxu0 0
  %1576 = vmatpush2.bf16.msra.mxu0 0
  %1577 = vmatprep.subr.bf16.mxu0 0
  %1578 = vmatpush2.bf16.msra.mxu0 0
  %1579 = vmatprep.subr.bf16.mxu0 0
  %1580 = vmatpush2.bf16.msra.mxu0 0
  %1581 = vmatprep.mubr.bf16.mxu0 0
  %1582 = vmatmul.mubr.bf16.gmra.mxu0 %v1497
  %v1583 = vpop.f32.mrf.mxu0
  %v1584 = vadd.f32 0.0, %v1583
  %v1585 = vpop.f32.mrf.mxu0
  %v1586 = vpop.f32.mrf.mxu0
  %v1587 = vpop.f32.mrf.mxu0
  %1588 = vdwg.mxu0
  %v1589 = vadd.f32 %v1484, %v1543
  %v1590 = vadd.f32 %v1485, %v1545
  %v1591 = vadd.f32 %v1486, %v1584
  %v1592 = vld [vmem:[%s607] sm:$0xf]
  %1593 = vrot.lane.b32.xlu0 %v1080, 108
  %v1594 = vpop.permute.xlu0 %1593
  %1595 = vrot.lane.b32.xlu0 %v1081, 108
  %v1596 = vpop.permute.xlu0 %1595
  %1597 = vrot.lane.b32.xlu0 %v1082, 108
  %v1598 = vpop.permute.xlu0 %1597
  %v1599 = vsel %vm615, %v1594, %v1596
  %v1600 = vsel %vm615, %v1596, %v1598
  %v1602 = vsel %vm98, %v1592, 0
  %v1605 = vsel %vm102, %v1599, 0
  %v1608 = vsel %vm102, %v1600, 0
  %v1611 = vsel %vm102, %v1598, 0
  %1613 = vmatprep.subr.bf16.mxu0 0
  %1614 = vmatpush1.bf16.msra.mxu0 0
  %1615 = vmatprep.subr.bf16.mxu0 0
  %1616 = vmatpush1.bf16.msra.mxu0 0
  %1617 = vmatprep.subr.bf16.mxu0 0
  %1618 = vmatpush1.bf16.msra.mxu0 0
  %1619 = vmatprep.subr.bf16.mxu0 0
  %1620 = vmatpush1.bf16.msra.mxu0 0
  %1621 = vmatprep.subr.bf16.mxu0 0
  %1622 = vmatpush1.bf16.msra.mxu0 0
  %1623 = vmatprep.subr.bf16.mxu0 0
  %1624 = vmatpush1.bf16.msra.mxu0 0
  %1625 = vmatprep.subr.bf16.mxu0 0
  %1626 = vmatpush1.bf16.msra.mxu0 0
  %1627 = vmatprep.subr.bf16.mxu0 %v1608
  %1628 = vmatpush1.bf16.msra.mxu0 %v1605
  %1629 = vmatprep.subr.bf16.mxu0 0
  %1630 = vmatpush2.bf16.msra.mxu0 0
  %1631 = vmatprep.subr.bf16.mxu0 0
  %1632 = vmatpush2.bf16.msra.mxu0 0
  %1633 = vmatprep.subr.bf16.mxu0 0
  %1634 = vmatpush2.bf16.msra.mxu0 0
  %1635 = vmatprep.subr.bf16.mxu0 0
  %1636 = vmatpush2.bf16.msra.mxu0 0
  %1637 = vmatprep.subr.bf16.mxu0 0
  %1638 = vmatpush2.bf16.msra.mxu0 0
  %1639 = vmatprep.subr.bf16.mxu0 0
  %1640 = vmatpush2.bf16.msra.mxu0 0
  %1641 = vmatprep.subr.bf16.mxu0 0
  %1642 = vmatpush2.bf16.msra.mxu0 0
  %1643 = vmatprep.subr.bf16.mxu0 0
  %1644 = vmatpush2.bf16.msra.mxu0 0
  %1645 = vmatprep.mubr.bf16.mxu0 0
  %1646 = vmatmul.mubr.bf16.gmra.mxu0 %v1602
  %v1647 = vpop.f32.mrf.mxu0
  %v1648 = vadd.f32 0.0, %v1647
  %v1649 = vpop.f32.mrf.mxu0
  %v1650 = vadd.f32 0.0, %v1649
  %v1651 = vpop.f32.mrf.mxu0
  %v1652 = vpop.f32.mrf.mxu0
  %1653 = vdwg.mxu0
  %1654 = vmatprep.subr.bf16.mxu0 0
  %1655 = vmatpush1.bf16.msra.mxu0 0
  %1656 = vmatprep.subr.bf16.mxu0 0
  %1657 = vmatpush1.bf16.msra.mxu0 0
  %1658 = vmatprep.subr.bf16.mxu0 0
  %1659 = vmatpush1.bf16.msra.mxu0 0
  %1660 = vmatprep.subr.bf16.mxu0 0
  %1661 = vmatpush1.bf16.msra.mxu0 0
  %1662 = vmatprep.subr.bf16.mxu0 0
  %1663 = vmatpush1.bf16.msra.mxu0 0
  %1664 = vmatprep.subr.bf16.mxu0 0
  %1665 = vmatpush1.bf16.msra.mxu0 0
  %1666 = vmatprep.subr.bf16.mxu0 0
  %1667 = vmatpush1.bf16.msra.mxu0 0
  %1668 = vmatprep.subr.bf16.mxu0 0
  %1669 = vmatpush1.bf16.msra.mxu0 %v1611
  %1670 = vmatprep.subr.bf16.mxu0 0
  %1671 = vmatpush2.bf16.msra.mxu0 0
  %1672 = vmatprep.subr.bf16.mxu0 0
  %1673 = vmatpush2.bf16.msra.mxu0 0
  %1674 = vmatprep.subr.bf16.mxu0 0
  %1675 = vmatpush2.bf16.msra.mxu0 0
  %1676 = vmatprep.subr.bf16.mxu0 0
  %1677 = vmatpush2.bf16.msra.mxu0 0
  %1678 = vmatprep.subr.bf16.mxu0 0
  %1679 = vmatpush2.bf16.msra.mxu0 0
  %1680 = vmatprep.subr.bf16.mxu0 0
  %1681 = vmatpush2.bf16.msra.mxu0 0
  %1682 = vmatprep.subr.bf16.mxu0 0
  %1683 = vmatpush2.bf16.msra.mxu0 0
  %1684 = vmatprep.subr.bf16.mxu0 0
  %1685 = vmatpush2.bf16.msra.mxu0 0
  %1686 = vmatprep.mubr.bf16.mxu0 0
  %1687 = vmatmul.mubr.bf16.gmra.mxu0 %v1602
  %v1688 = vpop.f32.mrf.mxu0
  %v1689 = vadd.f32 0.0, %v1688
  %v1690 = vpop.f32.mrf.mxu0
  %v1691 = vpop.f32.mrf.mxu0
  %v1692 = vpop.f32.mrf.mxu0
  %1693 = vdwg.mxu0
  %v1694 = vadd.f32 %v1589, %v1648
  %v1695 = vadd.f32 %v1590, %v1650
  %v1696 = vadd.f32 %v1591, %v1689
  %v1697 = vld [vmem:[%s714] sm:$0xf]
  %1698 = vrot.lane.b32.xlu0 %v1080, 92
  %v1699 = vpop.permute.xlu0 %1698
  %1700 = vrot.lane.b32.xlu0 %v1081, 92
  %v1701 = vpop.permute.xlu0 %1700
  %1702 = vrot.lane.b32.xlu0 %v1082, 92
  %v1703 = vpop.permute.xlu0 %1702
  %v1704 = vsel %vm722, %v1699, %v1701
  %v1705 = vsel %vm722, %v1701, %v1703
  %v1707 = vsel %vm98, %v1697, 0
  %v1710 = vsel %vm102, %v1704, 0
  %v1713 = vsel %vm102, %v1705, 0
  %v1716 = vsel %vm102, %v1703, 0
  %1718 = vmatprep.subr.bf16.mxu0 0
  %1719 = vmatpush1.bf16.msra.mxu0 0
  %1720 = vmatprep.subr.bf16.mxu0 0
  %1721 = vmatpush1.bf16.msra.mxu0 0
  %1722 = vmatprep.subr.bf16.mxu0 0
  %1723 = vmatpush1.bf16.msra.mxu0 0
  %1724 = vmatprep.subr.bf16.mxu0 0
  %1725 = vmatpush1.bf16.msra.mxu0 0
  %1726 = vmatprep.subr.bf16.mxu0 0
  %1727 = vmatpush1.bf16.msra.mxu0 0
  %1728 = vmatprep.subr.bf16.mxu0 0
  %1729 = vmatpush1.bf16.msra.mxu0 0
  %1730 = vmatprep.subr.bf16.mxu0 0
  %1731 = vmatpush1.bf16.msra.mxu0 0
  %1732 = vmatprep.subr.bf16.mxu0 %v1713
  %1733 = vmatpush1.bf16.msra.mxu0 %v1710
  %1734 = vmatprep.subr.bf16.mxu0 0
  %1735 = vmatpush2.bf16.msra.mxu0 0
  %1736 = vmatprep.subr.bf16.mxu0 0
  %1737 = vmatpush2.bf16.msra.mxu0 0
  %1738 = vmatprep.subr.bf16.mxu0 0
  %1739 = vmatpush2.bf16.msra.mxu0 0
  %1740 = vmatprep.subr.bf16.mxu0 0
  %1741 = vmatpush2.bf16.msra.mxu0 0
  %1742 = vmatprep.subr.bf16.mxu0 0
  %1743 = vmatpush2.bf16.msra.mxu0 0
  %1744 = vmatprep.subr.bf16.mxu0 0
  %1745 = vmatpush2.bf16.msra.mxu0 0
  %1746 = vmatprep.subr.bf16.mxu0 0
  %1747 = vmatpush2.bf16.msra.mxu0 0
  %1748 = vmatprep.subr.bf16.mxu0 0
  %1749 = vmatpush2.bf16.msra.mxu0 0
  %1750 = vmatprep.mubr.bf16.mxu0 0
  %1751 = vmatmul.mubr.bf16.gmra.mxu0 %v1707
  %v1752 = vpop.f32.mrf.mxu0
  %v1753 = vadd.f32 0.0, %v1752
  %v1754 = vpop.f32.mrf.mxu0
  %v1755 = vadd.f32 0.0, %v1754
  %v1756 = vpop.f32.mrf.mxu0
  %v1757 = vpop.f32.mrf.mxu0
  %1758 = vdwg.mxu0
  %1759 = vmatprep.subr.bf16.mxu0 0
  %1760 = vmatpush1.bf16.msra.mxu0 0
  %1761 = vmatprep.subr.bf16.mxu0 0
  %1762 = vmatpush1.bf16.msra.mxu0 0
  %1763 = vmatprep.subr.bf16.mxu0 0
  %1764 = vmatpush1.bf16.msra.mxu0 0
  %1765 = vmatprep.subr.bf16.mxu0 0
  %1766 = vmatpush1.bf16.msra.mxu0 0
  %1767 = vmatprep.subr.bf16.mxu0 0
  %1768 = vmatpush1.bf16.msra.mxu0 0
  %1769 = vmatprep.subr.bf16.mxu0 0
  %1770 = vmatpush1.bf16.msra.mxu0 0
  %1771 = vmatprep.subr.bf16.mxu0 0
  %1772 = vmatpush1.bf16.msra.mxu0 0
  %1773 = vmatprep.subr.bf16.mxu0 0
  %1774 = vmatpush1.bf16.msra.mxu0 %v1716
  %1775 = vmatprep.subr.bf16.mxu0 0
  %1776 = vmatpush2.bf16.msra.mxu0 0
  %1777 = vmatprep.subr.bf16.mxu0 0
  %1778 = vmatpush2.bf16.msra.mxu0 0
  %1779 = vmatprep.subr.bf16.mxu0 0
  %1780 = vmatpush2.bf16.msra.mxu0 0
  %1781 = vmatprep.subr.bf16.mxu0 0
  %1782 = vmatpush2.bf16.msra.mxu0 0
  %1783 = vmatprep.subr.bf16.mxu0 0
  %1784 = vmatpush2.bf16.msra.mxu0 0
  %1785 = vmatprep.subr.bf16.mxu0 0
  %1786 = vmatpush2.bf16.msra.mxu0 0
  %1787 = vmatprep.subr.bf16.mxu0 0
  %1788 = vmatpush2.bf16.msra.mxu0 0
  %1789 = vmatprep.subr.bf16.mxu0 0
  %1790 = vmatpush2.bf16.msra.mxu0 0
  %1791 = vmatprep.mubr.bf16.mxu0 0
  %1792 = vmatmul.mubr.bf16.gmra.mxu0 %v1707
  %v1793 = vpop.f32.mrf.mxu0
  %v1794 = vadd.f32 0.0, %v1793
  %v1795 = vpop.f32.mrf.mxu0
  %v1796 = vpop.f32.mrf.mxu0
  %v1797 = vpop.f32.mrf.mxu0
  %1798 = vdwg.mxu0
  %v1799 = vadd.f32 %v1694, %v1753
  %v1800 = vadd.f32 %v1695, %v1755
  %v1801 = vadd.f32 %v1696, %v1794
  %v1802 = vld [vmem:[%s821] sm:$0xf]
  %1803 = vrot.lane.b32.xlu0 %v1080, 91
  %v1804 = vpop.permute.xlu0 %1803
  %1805 = vrot.lane.b32.xlu0 %v1081, 91
  %v1806 = vpop.permute.xlu0 %1805
  %1807 = vrot.lane.b32.xlu0 %v1082, 91
  %v1808 = vpop.permute.xlu0 %1807
  %v1809 = vsel %vm829, %v1804, %v1806
  %v1810 = vsel %vm829, %v1806, %v1808
  %v1812 = vsel %vm98, %v1802, 0
  %v1815 = vsel %vm102, %v1809, 0
  %v1818 = vsel %vm102, %v1810, 0
  %v1821 = vsel %vm102, %v1808, 0
  %1823 = vmatprep.subr.bf16.mxu0 0
  %1824 = vmatpush1.bf16.msra.mxu0 0
  %1825 = vmatprep.subr.bf16.mxu0 0
  %1826 = vmatpush1.bf16.msra.mxu0 0
  %1827 = vmatprep.subr.bf16.mxu0 0
  %1828 = vmatpush1.bf16.msra.mxu0 0
  %1829 = vmatprep.subr.bf16.mxu0 0
  %1830 = vmatpush1.bf16.msra.mxu0 0
  %1831 = vmatprep.subr.bf16.mxu0 0
  %1832 = vmatpush1.bf16.msra.mxu0 0
  %1833 = vmatprep.subr.bf16.mxu0 0
  %1834 = vmatpush1.bf16.msra.mxu0 0
  %1835 = vmatprep.subr.bf16.mxu0 0
  %1836 = vmatpush1.bf16.msra.mxu0 0
  %1837 = vmatprep.subr.bf16.mxu0 %v1818
  %1838 = vmatpush1.bf16.msra.mxu0 %v1815
  %1839 = vmatprep.subr.bf16.mxu0 0
  %1840 = vmatpush2.bf16.msra.mxu0 0
  %1841 = vmatprep.subr.bf16.mxu0 0
  %1842 = vmatpush2.bf16.msra.mxu0 0
  %1843 = vmatprep.subr.bf16.mxu0 0
  %1844 = vmatpush2.bf16.msra.mxu0 0
  %1845 = vmatprep.subr.bf16.mxu0 0
  %1846 = vmatpush2.bf16.msra.mxu0 0
  %1847 = vmatprep.subr.bf16.mxu0 0
  %1848 = vmatpush2.bf16.msra.mxu0 0
  %1849 = vmatprep.subr.bf16.mxu0 0
  %1850 = vmatpush2.bf16.msra.mxu0 0
  %1851 = vmatprep.subr.bf16.mxu0 0
  %1852 = vmatpush2.bf16.msra.mxu0 0
  %1853 = vmatprep.subr.bf16.mxu0 0
  %1854 = vmatpush2.bf16.msra.mxu0 0
  %1855 = vmatprep.mubr.bf16.mxu0 0
  %1856 = vmatmul.mubr.bf16.gmra.mxu0 %v1812
  %v1857 = vpop.f32.mrf.mxu0
  %v1858 = vadd.f32 0.0, %v1857
  %v1859 = vpop.f32.mrf.mxu0
  %v1860 = vadd.f32 0.0, %v1859
  %v1861 = vpop.f32.mrf.mxu0
  %v1862 = vpop.f32.mrf.mxu0
  %1863 = vdwg.mxu0
  %1864 = vmatprep.subr.bf16.mxu0 0
  %1865 = vmatpush1.bf16.msra.mxu0 0
  %1866 = vmatprep.subr.bf16.mxu0 0
  %1867 = vmatpush1.bf16.msra.mxu0 0
  %1868 = vmatprep.subr.bf16.mxu0 0
  %1869 = vmatpush1.bf16.msra.mxu0 0
  %1870 = vmatprep.subr.bf16.mxu0 0
  %1871 = vmatpush1.bf16.msra.mxu0 0
  %1872 = vmatprep.subr.bf16.mxu0 0
  %1873 = vmatpush1.bf16.msra.mxu0 0
  %1874 = vmatprep.subr.bf16.mxu0 0
  %1875 = vmatpush1.bf16.msra.mxu0 0
  %1876 = vmatprep.subr.bf16.mxu0 0
  %1877 = vmatpush1.bf16.msra.mxu0 0
  %1878 = vmatprep.subr.bf16.mxu0 0
  %1879 = vmatpush1.bf16.msra.mxu0 %v1821
  %1880 = vmatprep.subr.bf16.mxu0 0
  %1881 = vmatpush2.bf16.msra.mxu0 0
  %1882 = vmatprep.subr.bf16.mxu0 0
  %1883 = vmatpush2.bf16.msra.mxu0 0
  %1884 = vmatprep.subr.bf16.mxu0 0
  %1885 = vmatpush2.bf16.msra.mxu0 0
  %1886 = vmatprep.subr.bf16.mxu0 0
  %1887 = vmatpush2.bf16.msra.mxu0 0
  %1888 = vmatprep.subr.bf16.mxu0 0
  %1889 = vmatpush2.bf16.msra.mxu0 0
  %1890 = vmatprep.subr.bf16.mxu0 0
  %1891 = vmatpush2.bf16.msra.mxu0 0
  %1892 = vmatprep.subr.bf16.mxu0 0
  %1893 = vmatpush2.bf16.msra.mxu0 0
  %1894 = vmatprep.subr.bf16.mxu0 0
  %1895 = vmatpush2.bf16.msra.mxu0 0
  %1896 = vmatprep.mubr.bf16.mxu0 0
  %1897 = vmatmul.mubr.bf16.gmra.mxu0 %v1812
  %v1898 = vpop.f32.mrf.mxu0
  %v1899 = vadd.f32 0.0, %v1898
  %v1900 = vpop.f32.mrf.mxu0
  %v1901 = vpop.f32.mrf.mxu0
  %v1902 = vpop.f32.mrf.mxu0
  %1903 = vdwg.mxu0
  %v1904 = vadd.f32 %v1799, %v1858
  %v1905 = vadd.f32 %v1800, %v1860
  %v1906 = vadd.f32 %v1801, %v1899
  %v1907 = vld [vmem:[%s928] sm:$0xf]
  %1908 = vrot.lane.b32.xlu0 %v1080, 90
  %v1909 = vpop.permute.xlu0 %1908
  %1910 = vrot.lane.b32.xlu0 %v1081, 90
  %v1911 = vpop.permute.xlu0 %1910
  %1912 = vrot.lane.b32.xlu0 %v1082, 90
  %v1913 = vpop.permute.xlu0 %1912
  %v1914 = vsel %vm936, %v1909, %v1911
  %v1915 = vsel %vm936, %v1911, %v1913
  %v1917 = vsel %vm98, %v1907, 0
  %v1920 = vsel %vm102, %v1914, 0
  %v1923 = vsel %vm102, %v1915, 0
  %v1926 = vsel %vm102, %v1913, 0
  %1928 = vmatprep.subr.bf16.mxu0 0
  %1929 = vmatpush1.bf16.msra.mxu0 0
  %1930 = vmatprep.subr.bf16.mxu0 0
  %1931 = vmatpush1.bf16.msra.mxu0 0
  %1932 = vmatprep.subr.bf16.mxu0 0
  %1933 = vmatpush1.bf16.msra.mxu0 0
  %1934 = vmatprep.subr.bf16.mxu0 0
  %1935 = vmatpush1.bf16.msra.mxu0 0
  %1936 = vmatprep.subr.bf16.mxu0 0
  %1937 = vmatpush1.bf16.msra.mxu0 0
  %1938 = vmatprep.subr.bf16.mxu0 0
  %1939 = vmatpush1.bf16.msra.mxu0 0
  %1940 = vmatprep.subr.bf16.mxu0 0
  %1941 = vmatpush1.bf16.msra.mxu0 0
  %1942 = vmatprep.subr.bf16.mxu0 %v1923
  %1943 = vmatpush1.bf16.msra.mxu0 %v1920
  %1944 = vmatprep.subr.bf16.mxu0 0
  %1945 = vmatpush2.bf16.msra.mxu0 0
  %1946 = vmatprep.subr.bf16.mxu0 0
  %1947 = vmatpush2.bf16.msra.mxu0 0
  %1948 = vmatprep.subr.bf16.mxu0 0
  %1949 = vmatpush2.bf16.msra.mxu0 0
  %1950 = vmatprep.subr.bf16.mxu0 0
  %1951 = vmatpush2.bf16.msra.mxu0 0
  %1952 = vmatprep.subr.bf16.mxu0 0
  %1953 = vmatpush2.bf16.msra.mxu0 0
  %1954 = vmatprep.subr.bf16.mxu0 0
  %1955 = vmatpush2.bf16.msra.mxu0 0
  %1956 = vmatprep.subr.bf16.mxu0 0
  %1957 = vmatpush2.bf16.msra.mxu0 0
  %1958 = vmatprep.subr.bf16.mxu0 0
  %1959 = vmatpush2.bf16.msra.mxu0 0
  %1960 = vmatprep.mubr.bf16.mxu0 0
  %1961 = vmatmul.mubr.bf16.gmra.mxu0 %v1917
  %v1962 = vpop.f32.mrf.mxu0
  %v1963 = vadd.f32 0.0, %v1962
  %v1964 = vpop.f32.mrf.mxu0
  %v1965 = vadd.f32 0.0, %v1964
  %v1966 = vpop.f32.mrf.mxu0
  %v1967 = vpop.f32.mrf.mxu0
  %1968 = vdwg.mxu0
  %1969 = vmatprep.subr.bf16.mxu0 0
  %1970 = vmatpush1.bf16.msra.mxu0 0
  %1971 = vmatprep.subr.bf16.mxu0 0
  %1972 = vmatpush1.bf16.msra.mxu0 0
  %1973 = vmatprep.subr.bf16.mxu0 0
  %1974 = vmatpush1.bf16.msra.mxu0 0
  %1975 = vmatprep.subr.bf16.mxu0 0
  %1976 = vmatpush1.bf16.msra.mxu0 0
  %1977 = vmatprep.subr.bf16.mxu0 0
  %1978 = vmatpush1.bf16.msra.mxu0 0
  %1979 = vmatprep.subr.bf16.mxu0 0
  %1980 = vmatpush1.bf16.msra.mxu0 0
  %1981 = vmatprep.subr.bf16.mxu0 0
  %1982 = vmatpush1.bf16.msra.mxu0 0
  %1983 = vmatprep.subr.bf16.mxu0 0
  %1984 = vmatpush1.bf16.msra.mxu0 %v1926
  %1985 = vmatprep.subr.bf16.mxu0 0
  %1986 = vmatpush2.bf16.msra.mxu0 0
  %1987 = vmatprep.subr.bf16.mxu0 0
  %1988 = vmatpush2.bf16.msra.mxu0 0
  %1989 = vmatprep.subr.bf16.mxu0 0
  %1990 = vmatpush2.bf16.msra.mxu0 0
  %1991 = vmatprep.subr.bf16.mxu0 0
  %1992 = vmatpush2.bf16.msra.mxu0 0
  %1993 = vmatprep.subr.bf16.mxu0 0
  %1994 = vmatpush2.bf16.msra.mxu0 0
  %1995 = vmatprep.subr.bf16.mxu0 0
  %1996 = vmatpush2.bf16.msra.mxu0 0
  %1997 = vmatprep.subr.bf16.mxu0 0
  %1998 = vmatpush2.bf16.msra.mxu0 0
  %1999 = vmatprep.subr.bf16.mxu0 0
  %2000 = vmatpush2.bf16.msra.mxu0 0
  %2001 = vmatprep.mubr.bf16.mxu0 0
  %2002 = vmatmul.mubr.bf16.gmra.mxu0 %v1917
  %v2003 = vpop.f32.mrf.mxu0
  %v2004 = vadd.f32 0.0, %v2003
  %v2005 = vpop.f32.mrf.mxu0
  %v2006 = vpop.f32.mrf.mxu0
  %v2007 = vpop.f32.mrf.mxu0
  %2008 = vdwg.mxu0
  %v2009 = vadd.f32 %v1904, %v1963
  %v2010 = vadd.f32 %v1905, %v1965
  %v2011 = vadd.f32 %v1906, %v2004
  %v2012 = vpack.c.bf16 %v2009, %v2009
  %v2013 = vpack.c.bf16 %v2010, %v2010
  %v2014 = vpack.c.bf16 %v2011, %v2011
  %v2018 = vunpack.c.l.b16 %v2012
  %v2019 = vunpack.c.l.b16 %v2013
  %v2020 = vunpack.c.l.b16 %v2014
  %v2021 = vpack.c.b16 %v2019, %v2018
  %v2022 = vpack.c.b16 %v2020, %v2020
  %s2025 = scalar_lea.vmem %s2, 12
  %2026 = vst [vmem:[%s2025] sm:$0xff] %v2021
  %2027 = vst.msk [vmem:[%s2025 + $0x8] sm:$0xf] %vm1049, %v2022
  %v2028 = vmul.f32 %v2009, %v73
  %v2029 = vmul.f32 %v2010, %v74
  %v2030 = vmul.f32 %v2011, %v75
  %v2031 = vadd.f32 %v2028, %v2029
  %v2032 = vsel %vm1055, %v2030, 0.0
  %v2033 = vadd.f32 %v2031, %v2032
  %2034 = vadd.xlane.f32.xlu0 %v2033
  %v2035 = vpop.xlane.xlu0 %2034
  %v2036 = vadd.f32 %v1060, %v2035
  %v2037 = vmul.f32 %v2028, %v2009
  %v2038 = vmul.f32 %v2029, %v2010
  %v2039 = vmul.f32 %v2030, %v2011
  %v2040 = vadd.f32 %v2037, %v2038
  %v2041 = vsel %vm1055, %v2039, 0.0
  %v2042 = vadd.f32 %v2040, %v2041
  %2043 = vadd.xlane.f32.xlu0 %v2042
  %v2044 = vpop.xlane.xlu0 %2043
  %v2045 = vadd.f32 %v1069, %v2044
  %vm2046 = vcmask 7168
  %2047 = vst.msk [vmem:[%s3] sm:$0xff] %vm2046, %v2036
  %2048 = vst.msk [vmem:[%s4] sm:$0xff] %vm2046, %v2045
  // Predicated region
  $region10: #{conv_block_forward.2} parent=0 // pred_check
    _
  $region11: #{conv_block_forward.2} parent=0 // pred_check_branch
    %2050 = sbr.rel (0) target = $region13
  $region12: #{conv_block_forward.2} parent=0 // pred_region
    _
  $region13: #{conv_block_forward.2} parent=0 // pred_fallthru
    _
  // Predicated region
  $region14: #{conv_block_forward.2} parent=0 // pred_check
    _
  $region15: #{conv_block_forward.2} parent=0 // pred_check_branch
    %2052 = sbr.rel (0) target = $region17
  $region16: #{conv_block_forward.2} parent=0 // pred_region
    _
  $region17: #{conv_block_forward.2} parent=0 // pred_fallthru
    _
  // Predicated region
  $region18: #{conv_block_forward.2} parent=0 // pred_check
    _
  $region19: #{conv_block_forward.2} parent=0 // pred_check_branch
    %2054 = sbr.rel (0) target = $region21
  $region20: #{conv_block_forward.2} parent=0 // pred_region
    _
  $region21: #{conv_block_forward.2} parent=0 // pred_fallthru
    _
  // Predicated region
  $region22: #{conv_block_forward.2} parent=0 // pred_check
    _
  $region23: #{conv_block_forward.2} parent=0 // pred_check_branch
    %2056 = sbr.rel (0) target = $region25
  $region24: #{conv_block_forward.2} parent=0 // pred_region
    _
  $region25: #{conv_block_forward.2} parent=0 // pred_fallthru
    _
  // Predicated region
  $region26: #{conv_block_forward.2} parent=0 // pred_check
    _
  $region27: #{conv_block_forward.2} parent=0 // pred_check_branch
    %2058 = sbr.rel (0) target = $region29
  $region28: #{conv_block_forward.2} parent=0 // pred_region
    _
  $region29: #{conv_block_forward.2} parent=0 // pred_fallthru
    _
  // Predicated region
  $region30: #{conv_block_forward.2} parent=0 // pred_check
    _
  $region31: #{conv_block_forward.2} parent=0 // pred_check_branch
    %2060 = sbr.rel (0) target = $region33
  $region32: #{conv_block_forward.2} parent=0 // pred_region
    _
  $region33: #{conv_block_forward.2} parent=0 // pred_fallthru
    _

</llo_original>
